<compile_context>
chip_gen: v5e
topology: v5e:2x2
jax: 0.10.0
libtpu: 0.0.40
codegen_flags: <defaults>
</compile_context>

<pallas_src>
import jax
import jax.numpy as jnp
from jax.experimental import pallas as pl
from jax.experimental.pallas import tpu as pltpu


def _lstm_fc_kernel(x_ref,      # [T*B, I]   time-major, flattened input
                    wih0_ref,   # [I, 4H]    layer-0 input weights (transposed)
                    whh0_ref,   # [H, 4H]    layer-0 recurrent weights (transposed)
                    b0_ref,     # [1, 4H]    layer-0 bias (b_ih + b_hh)
                    w1_ref,     # [2H, 4H]   layer-1 [wih1; whh1] stacked
                    b1_ref,     # [1, 4H]    layer-1 bias (b_ih + b_hh)
                    wfc_ref,    # [H, O]     final Linear weight (transposed)
                    bfc_ref,    # [1, O]     final Linear bias
                    out_ref):   # [B, O]
    TB, _ = x_ref.shape
    B = out_ref.shape[0]
    T = TB // B
    H = whh0_ref.shape[0]

    whh0 = whh0_ref[...]
    w1 = w1_ref[...]

    # Hoisted layer-0 input projection: one MXU call for all timesteps,
    # bias pre-added (removes T tiny matmuls + T broadcast-adds from the
    # serial recurrence).
    xw0 = (jnp.dot(x_ref[...], wih0_ref[...],
                   preferred_element_type=jnp.float32)
           + b0_ref[...])                                    # [T*B, 4H]

    # Hoist the layer-1 bias broadcast out of the loop (broadcast_in_dim is
    # not CSE'd across unrolled iterations).
    b1 = jnp.broadcast_to(b1_ref[...], (B, 4 * H))

    def cell(gates, c):
        # Two full-vreg EUP passes (sigmoid + tanh over all 4H=128 lanes)
        # instead of four 32-lane sliced ones; gate extraction is cheap
        # VALU lane selects off the serial EUP path.
        sg = jax.nn.sigmoid(gates)
        tg = jnp.tanh(gates)
        i_g = sg[:, 0 * H:1 * H]
        f_g = sg[:, 1 * H:2 * H]
        g_g = tg[:, 2 * H:3 * H]
        o_g = sg[:, 3 * H:4 * H]
        c_new = f_g * c + i_g * g_g
        h_new = o_g * jnp.tanh(c_new)
        return h_new, c_new

    zeros = jnp.zeros((B, H), jnp.float32)
    h0 = c0 = h1 = c1 = zeros

    # Fully unrolled recurrence (T static & small): static slice indices and
    # cross-iteration scheduling visibility. Per step: 2 matmuls (down from 4).
    for t in range(T):
        gates0 = xw0[t * B:(t + 1) * B, :] + jnp.dot(
            h0, whh0, preferred_element_type=jnp.float32)
        h0, c0 = cell(gates0, c0)

        gates1 = jnp.dot(jnp.concatenate([h0, h1], axis=-1), w1,
                         preferred_element_type=jnp.float32) + b1
        h1, c1 = cell(gates1, c1)

    # fc on the last timestep's top-layer hidden state (bias folded here).
    out_ref[...] = (jnp.dot(h1, wfc_ref[...],
                            preferred_element_type=jnp.float32)
                    + bfc_ref[...])


def lstm_model_forward(x, params):
    """x: [B, T, I] (batch_first, like the PyTorch module). Returns [B, O]."""
    B, T, I = x.shape
    H = params["whh0"].shape[0]
    O = params["wfc"].shape[1]

    # Time-major and flattened to [T*B, I] so the kernel performs a single
    # batched input projection for all timesteps.
    x_flat = jnp.transpose(x, (1, 0, 2)).reshape(T * B, I).astype(jnp.float32)
    # Stack layer-1 input/recurrent weights so each step needs one matmul.
    w1 = jnp.concatenate([params["wih1"], params["whh1"]], axis=0)  # [2H, 4H]

    vmem = pl.BlockSpec(memory_space=pltpu.MemorySpace.VMEM)
    out = pl.pallas_call(
        _lstm_fc_kernel,
        out_shape=jax.ShapeDtypeStruct((B, O), jnp.float32),
        in_specs=[vmem] * 8,
        out_specs=vmem,
    )(x_flat,
      params["wih0"], params["whh0"], params["b0"],
      w1, params["b1"],
      params["wfc"], params["bfc"])
    return out


def init_params(key, input_size, hidden_size, output_size):
    """Deterministic init mimicking PyTorch's uniform(-1/sqrt(H), 1/sqrt(H))."""
    H = hidden_size
    bound = 1.0 / jnp.sqrt(jnp.float32(H))
    ks = jax.random.split(key, 10)

    def u(k, shape):
        return jax.random.uniform(k, shape, jnp.float32, -bound, bound)

    # stored already transposed for x @ W^T style matmuls
    params = {
        "wih0": u(ks[0], (input_size, 4 * H)),
        "whh0": u(ks[1], (H, 4 * H)),
        "b0":   u(ks[2], (1, 4 * H)) + u(ks[3], (1, 4 * H)),   # b_ih + b_hh
        "wih1": u(ks[4], (H, 4 * H)),
        "whh1": u(ks[5], (H, 4 * H)),
        "b1":   u(ks[6], (1, 4 * H)) + u(ks[7], (1, 4 * H)),
        "wfc":  u(ks[8], (H, output_size)),
        "bfc":  u(ks[9], (1, output_size)),
    }
    return params


def lstm_model_reference(x, params):
    """Pure-JAX reference of the same forward (for correctness check)."""
    B, T, I = x.shape
    H = params["whh0"].shape[0]

    def cell(xt, h, c, wih, whh, b):
        gates = xt @ wih + h @ whh + b
        i_g = jax.nn.sigmoid(gates[:, 0 * H:1 * H])
        f_g = jax.nn.sigmoid(gates[:, 1 * H:2 * H])
        g_g = jnp.tanh(gates[:, 2 * H:3 * H])
        o_g = jax.nn.sigmoid(gates[:, 3 * H:4 * H])
        c = f_g * c + i_g * g_g
        h = o_g * jnp.tanh(c)
        return h, c

    h0 = c0 = h1 = c1 = jnp.zeros((B, H), jnp.float32)
    for t in range(T):
        xt = x[:, t, :]
        h0, c0 = cell(xt, h0, c0, params["wih0"], params["whh0"], params["b0"])
        h1, c1 = cell(h0, h1, c1, params["wih1"], params["whh1"], params["b1"])
    return h1 @ params["wfc"] + params["bfc"]


if __name__ == "__main__":
    # Small shapes consistent with the module's forward:
    #   x: [batch_size, seq_len, input_size]
    batch_size, seq_len, input_size = 2, 8, 4
    hidden_size, num_layers, output_size = 32, 2, 4

    key = jax.random.PRNGKey(0)
    kx, kp = jax.random.split(key)
    x = jax.random.normal(kx, (batch_size, seq_len, input_size), jnp.float32)
    params = init_params(kp, input_size, hidden_size, output_size)

    out = lstm_model_forward(x, params)
    out = jax.block_until_ready(out)

    ref = lstm_model_reference(x, params)
    assert out.shape == (batch_size, output_size)
    assert jnp.allclose(out, ref, atol=1e-5, rtol=1e-5), "mismatch vs reference"

    print("KERNEL_OK")
</pallas_src>

<mosaic_0001>
module attributes {stable_mosaic.version = 11 : i64} {
  func.func @_lstm_fc_kernel(%arg0: memref<16x4xf32, #tpu.memory_space<vmem>>, %arg1: memref<4x128xf32, #tpu.memory_space<vmem>>, %arg2: memref<32x128xf32, #tpu.memory_space<vmem>>, %arg3: memref<1x128xf32, #tpu.memory_space<vmem>>, %arg4: memref<64x128xf32, #tpu.memory_space<vmem>>, %arg5: memref<1x128xf32, #tpu.memory_space<vmem>>, %arg6: memref<32x4xf32, #tpu.memory_space<vmem>>, %arg7: memref<1x4xf32, #tpu.memory_space<vmem>>, %arg8: memref<2x4xf32, #tpu.memory_space<vmem>>) attributes {dimension_semantics = [], scalar_prefetch = 0 : i64, scratch_operands = 0 : i64, tpu.core_type = #tpu.core_type<tc>} {
    %c0 = arith.constant 0 : index
    %c0_0 = arith.constant 0 : index
    %0 = vector.load %arg2[%c0, %c0_0] : memref<32x128xf32, #tpu.memory_space<vmem>>, vector<32x128xf32>
    %c0_1 = arith.constant 0 : index
    %c0_2 = arith.constant 0 : index
    %1 = vector.load %arg4[%c0_1, %c0_2] : memref<64x128xf32, #tpu.memory_space<vmem>>, vector<64x128xf32>
    %c0_3 = arith.constant 0 : index
    %c0_4 = arith.constant 0 : index
    %2 = vector.load %arg0[%c0_3, %c0_4] : memref<16x4xf32, #tpu.memory_space<vmem>>, vector<16x4xf32>
    %c0_5 = arith.constant 0 : index
    %c0_6 = arith.constant 0 : index
    %3 = vector.load %arg1[%c0_5, %c0_6] : memref<4x128xf32, #tpu.memory_space<vmem>>, vector<4x128xf32>
    %cst = arith.constant dense<0.000000e+00> : vector<16x128xf32>
    %4 = tpu.matmul %2, %3, %cst {dimension_numbers = #tpu.dot_dimension_numbers<[1], [0], [0], [1], [0, 0, 1, 1], [], []>} : vector<16x4xf32>, vector<4x128xf32>, vector<16x128xf32> -> vector<16x128xf32>
    %c0_7 = arith.constant 0 : index
    %c0_8 = arith.constant 0 : index
    %5 = vector.load %arg3[%c0_7, %c0_8] : memref<1x128xf32, #tpu.memory_space<vmem>>, vector<1x128xf32>
    %6 = vector.broadcast %5 : vector<1x128xf32> to vector<16x128xf32>
    %7 = arith.addf %4, %6 : vector<16x128xf32>
    %c0_9 = arith.constant 0 : index
    %c0_10 = arith.constant 0 : index
    %8 = vector.load %arg5[%c0_9, %c0_10] : memref<1x128xf32, #tpu.memory_space<vmem>>, vector<1x128xf32>
    %9 = vector.shape_cast %8 : vector<1x128xf32> to vector<1x128xf32>
    %10 = vector.broadcast %9 : vector<1x128xf32> to vector<2x128xf32>
    %cst_11 = arith.constant 0.000000e+00 : f32
    %11 = vector.broadcast %cst_11 : f32 to vector<2x32xf32>
    %12 = vector.extract_strided_slice %7 {offsets = [0, 0], sizes = [2, 128], strides = [1, 1]} : vector<16x128xf32> to vector<2x128xf32>
    %cst_12 = arith.constant dense<0.000000e+00> : vector<2x128xf32>
    %13 = tpu.matmul %11, %0, %cst_12 {dimension_numbers = #tpu.dot_dimension_numbers<[1], [0], [0], [1], [0, 0, 1, 1], [], []>} : vector<2x32xf32>, vector<32x128xf32>, vector<2x128xf32> -> vector<2x128xf32>
    %14 = arith.addf %12, %13 : vector<2x128xf32>
    %15 = arith.negf %14 : vector<2x128xf32>
    %16 = math.exp %15 : vector<2x128xf32>
    %cst_13 = arith.constant 1.000000e+00 : f32
    %17 = vector.broadcast %cst_13 : f32 to vector<2x128xf32>
    %18 = arith.addf %17, %16 : vector<2x128xf32>
    %19 = arith.divf %17, %18 : vector<2x128xf32>
    %20 = math.tanh %14 : vector<2x128xf32>
    %21 = vector.extract_strided_slice %19 {offsets = [0, 0], sizes = [2, 32], strides = [1, 1]} : vector<2x128xf32> to vector<2x32xf32>
    %22 = vector.extract_strided_slice %19 {offsets = [0, 32], sizes = [2, 32], strides = [1, 1]} : vector<2x128xf32> to vector<2x32xf32>
    %23 = vector.extract_strided_slice %20 {offsets = [0, 64], sizes = [2, 32], strides = [1, 1]} : vector<2x128xf32> to vector<2x32xf32>
    %24 = vector.extract_strided_slice %19 {offsets = [0, 96], sizes = [2, 32], strides = [1, 1]} : vector<2x128xf32> to vector<2x32xf32>
    %25 = arith.mulf %22, %11 : vector<2x32xf32>
    %26 = arith.mulf %21, %23 : vector<2x32xf32>
    %27 = arith.addf %25, %26 : vector<2x32xf32>
    %28 = math.tanh %27 : vector<2x32xf32>
    %29 = arith.mulf %24, %28 : vector<2x32xf32>
    %30 = tpu.concatenate %29, %11 in 1 : vector<2x32xf32>, vector<2x32xf32> -> vector<2x64xf32>
    %cst_14 = arith.constant dense<0.000000e+00> : vector<2x128xf32>
    %31 = tpu.matmul %30, %1, %cst_14 {dimension_numbers = #tpu.dot_dimension_numbers<[1], [0], [0], [1], [0, 0, 1, 1], [], []>} : vector<2x64xf32>, vector<64x128xf32>, vector<2x128xf32> -> vector<2x128xf32>
    %32 = arith.addf %31, %10 : vector<2x128xf32>
    %33 = arith.negf %32 : vector<2x128xf32>
    %34 = math.exp %33 : vector<2x128xf32>
    %cst_15 = arith.constant 1.000000e+00 : f32
    %35 = vector.broadcast %cst_15 : f32 to vector<2x128xf32>
    %36 = arith.addf %35, %34 : vector<2x128xf32>
    %37 = arith.divf %35, %36 : vector<2x128xf32>
    %38 = math.tanh %32 : vector<2x128xf32>
    %39 = vector.extract_strided_slice %37 {offsets = [0, 0], sizes = [2, 32], strides = [1, 1]} : vector<2x128xf32> to vector<2x32xf32>
    %40 = vector.extract_strided_slice %37 {offsets = [0, 32], sizes = [2, 32], strides = [1, 1]} : vector<2x128xf32> to vector<2x32xf32>
    %41 = vector.extract_strided_slice %38 {offsets = [0, 64], sizes = [2, 32], strides = [1, 1]} : vector<2x128xf32> to vector<2x32xf32>
    %42 = vector.extract_strided_slice %37 {offsets = [0, 96], sizes = [2, 32], strides = [1, 1]} : vector<2x128xf32> to vector<2x32xf32>
    %43 = arith.mulf %40, %11 : vector<2x32xf32>
    %44 = arith.mulf %39, %41 : vector<2x32xf32>
    %45 = arith.addf %43, %44 : vector<2x32xf32>
    %46 = math.tanh %45 : vector<2x32xf32>
    %47 = arith.mulf %42, %46 : vector<2x32xf32>
    %48 = vector.extract_strided_slice %7 {offsets = [2, 0], sizes = [2, 128], strides = [1, 1]} : vector<16x128xf32> to vector<2x128xf32>
    %cst_16 = arith.constant dense<0.000000e+00> : vector<2x128xf32>
    %49 = tpu.matmul %29, %0, %cst_16 {dimension_numbers = #tpu.dot_dimension_numbers<[1], [0], [0], [1], [0, 0, 1, 1], [], []>} : vector<2x32xf32>, vector<32x128xf32>, vector<2x128xf32> -> vector<2x128xf32>
    %50 = arith.addf %48, %49 : vector<2x128xf32>
    %51 = arith.negf %50 : vector<2x128xf32>
    %52 = math.exp %51 : vector<2x128xf32>
    %cst_17 = arith.constant 1.000000e+00 : f32
    %53 = vector.broadcast %cst_17 : f32 to vector<2x128xf32>
    %54 = arith.addf %53, %52 : vector<2x128xf32>
    %55 = arith.divf %53, %54 : vector<2x128xf32>
    %56 = math.tanh %50 : vector<2x128xf32>
    %57 = vector.extract_strided_slice %55 {offsets = [0, 0], sizes = [2, 32], strides = [1, 1]} : vector<2x128xf32> to vector<2x32xf32>
    %58 = vector.extract_strided_slice %55 {offsets = [0, 32], sizes = [2, 32], strides = [1, 1]} : vector<2x128xf32> to vector<2x32xf32>
    %59 = vector.extract_strided_slice %56 {offsets = [0, 64], sizes = [2, 32], strides = [1, 1]} : vector<2x128xf32> to vector<2x32xf32>
    %60 = vector.extract_strided_slice %55 {offsets = [0, 96], sizes = [2, 32], strides = [1, 1]} : vector<2x128xf32> to vector<2x32xf32>
    %61 = arith.mulf %58, %27 : vector<2x32xf32>
    %62 = arith.mulf %57, %59 : vector<2x32xf32>
    %63 = arith.addf %61, %62 : vector<2x32xf32>
    %64 = math.tanh %63 : vector<2x32xf32>
    %65 = arith.mulf %60, %64 : vector<2x32xf32>
    %66 = tpu.concatenate %65, %47 in 1 : vector<2x32xf32>, vector<2x32xf32> -> vector<2x64xf32>
    %cst_18 = arith.constant dense<0.000000e+00> : vector<2x128xf32>
    %67 = tpu.matmul %66, %1, %cst_18 {dimension_numbers = #tpu.dot_dimension_numbers<[1], [0], [0], [1], [0, 0, 1, 1], [], []>} : vector<2x64xf32>, vector<64x128xf32>, vector<2x128xf32> -> vector<2x128xf32>
    %68 = arith.addf %67, %10 : vector<2x128xf32>
    %69 = arith.negf %68 : vector<2x128xf32>
    %70 = math.exp %69 : vector<2x128xf32>
    %cst_19 = arith.constant 1.000000e+00 : f32
    %71 = vector.broadcast %cst_19 : f32 to vector<2x128xf32>
    %72 = arith.addf %71, %70 : vector<2x128xf32>
    %73 = arith.divf %71, %72 : vector<2x128xf32>
    %74 = math.tanh %68 : vector<2x128xf32>
    %75 = vector.extract_strided_slice %73 {offsets = [0, 0], sizes = [2, 32], strides = [1, 1]} : vector<2x128xf32> to vector<2x32xf32>
    %76 = vector.extract_strided_slice %73 {offsets = [0, 32], sizes = [2, 32], strides = [1, 1]} : vector<2x128xf32> to vector<2x32xf32>
    %77 = vector.extract_strided_slice %74 {offsets = [0, 64], sizes = [2, 32], strides = [1, 1]} : vector<2x128xf32> to vector<2x32xf32>
    %78 = vector.extract_strided_slice %73 {offsets = [0, 96], sizes = [2, 32], strides = [1, 1]} : vector<2x128xf32> to vector<2x32xf32>
    %79 = arith.mulf %76, %45 : vector<2x32xf32>
    %80 = arith.mulf %75, %77 : vector<2x32xf32>
    %81 = arith.addf %79, %80 : vector<2x32xf32>
    %82 = math.tanh %81 : vector<2x32xf32>
    %83 = arith.mulf %78, %82 : vector<2x32xf32>
    %84 = vector.extract_strided_slice %7 {offsets = [4, 0], sizes = [2, 128], strides = [1, 1]} : vector<16x128xf32> to vector<2x128xf32>
    %cst_20 = arith.constant dense<0.000000e+00> : vector<2x128xf32>
    %85 = tpu.matmul %65, %0, %cst_20 {dimension_numbers = #tpu.dot_dimension_numbers<[1], [0], [0], [1], [0, 0, 1, 1], [], []>} : vector<2x32xf32>, vector<32x128xf32>, vector<2x128xf32> -> vector<2x128xf32>
    %86 = arith.addf %84, %85 : vector<2x128xf32>
    %87 = arith.negf %86 : vector<2x128xf32>
    %88 = math.exp %87 : vector<2x128xf32>
    %cst_21 = arith.constant 1.000000e+00 : f32
    %89 = vector.broadcast %cst_21 : f32 to vector<2x128xf32>
    %90 = arith.addf %89, %88 : vector<2x128xf32>
    %91 = arith.divf %89, %90 : vector<2x128xf32>
    %92 = math.tanh %86 : vector<2x128xf32>
    %93 = vector.extract_strided_slice %91 {offsets = [0, 0], sizes = [2, 32], strides = [1, 1]} : vector<2x128xf32> to vector<2x32xf32>
    %94 = vector.extract_strided_slice %91 {offsets = [0, 32], sizes = [2, 32], strides = [1, 1]} : vector<2x128xf32> to vector<2x32xf32>
    %95 = vector.extract_strided_slice %92 {offsets = [0, 64], sizes = [2, 32], strides = [1, 1]} : vector<2x128xf32> to vector<2x32xf32>
    %96 = vector.extract_strided_slice %91 {offsets = [0, 96], sizes = [2, 32], strides = [1, 1]} : vector<2x128xf32> to vector<2x32xf32>
    %97 = arith.mulf %94, %63 : vector<2x32xf32>
    %98 = arith.mulf %93, %95 : vector<2x32xf32>
    %99 = arith.addf %97, %98 : vector<2x32xf32>
    %100 = math.tanh %99 : vector<2x32xf32>
    %101 = arith.mulf %96, %100 : vector<2x32xf32>
    %102 = tpu.concatenate %101, %83 in 1 : vector<2x32xf32>, vector<2x32xf32> -> vector<2x64xf32>
    %cst_22 = arith.constant dense<0.000000e+00> : vector<2x128xf32>
    %103 = tpu.matmul %102, %1, %cst_22 {dimension_numbers = #tpu.dot_dimension_numbers<[1], [0], [0], [1], [0, 0, 1, 1], [], []>} : vector<2x64xf32>, vector<64x128xf32>, vector<2x128xf32> -> vector<2x128xf32>
    %104 = arith.addf %103, %10 : vector<2x128xf32>
    %105 = arith.negf %104 : vector<2x128xf32>
    %106 = math.exp %105 : vector<2x128xf32>
    %cst_23 = arith.constant 1.000000e+00 : f32
    %107 = vector.broadcast %cst_23 : f32 to vector<2x128xf32>
    %108 = arith.addf %107, %106 : vector<2x128xf32>
    %109 = arith.divf %107, %108 : vector<2x128xf32>
    %110 = math.tanh %104 : vector<2x128xf32>
    %111 = vector.extract_strided_slice %109 {offsets = [0, 0], sizes = [2, 32], strides = [1, 1]} : vector<2x128xf32> to vector<2x32xf32>
    %112 = vector.extract_strided_slice %109 {offsets = [0, 32], sizes = [2, 32], strides = [1, 1]} : vector<2x128xf32> to vector<2x32xf32>
    %113 = vector.extract_strided_slice %110 {offsets = [0, 64], sizes = [2, 32], strides = [1, 1]} : vector<2x128xf32> to vector<2x32xf32>
    %114 = vector.extract_strided_slice %109 {offsets = [0, 96], sizes = [2, 32], strides = [1, 1]} : vector<2x128xf32> to vector<2x32xf32>
    %115 = arith.mulf %112, %81 : vector<2x32xf32>
    %116 = arith.mulf %111, %113 : vector<2x32xf32>
    %117 = arith.addf %115, %116 : vector<2x32xf32>
    %118 = math.tanh %117 : vector<2x32xf32>
    %119 = arith.mulf %114, %118 : vector<2x32xf32>
    %120 = vector.extract_strided_slice %7 {offsets = [6, 0], sizes = [2, 128], strides = [1, 1]} : vector<16x128xf32> to vector<2x128xf32>
    %cst_24 = arith.constant dense<0.000000e+00> : vector<2x128xf32>
    %121 = tpu.matmul %101, %0, %cst_24 {dimension_numbers = #tpu.dot_dimension_numbers<[1], [0], [0], [1], [0, 0, 1, 1], [], []>} : vector<2x32xf32>, vector<32x128xf32>, vector<2x128xf32> -> vector<2x128xf32>
    %122 = arith.addf %120, %121 : vector<2x128xf32>
    %123 = arith.negf %122 : vector<2x128xf32>
    %124 = math.exp %123 : vector<2x128xf32>
    %cst_25 = arith.constant 1.000000e+00 : f32
    %125 = vector.broadcast %cst_25 : f32 to vector<2x128xf32>
    %126 = arith.addf %125, %124 : vector<2x128xf32>
    %127 = arith.divf %125, %126 : vector<2x128xf32>
    %128 = math.tanh %122 : vector<2x128xf32>
    %129 = vector.extract_strided_slice %127 {offsets = [0, 0], sizes = [2, 32], strides = [1, 1]} : vector<2x128xf32> to vector<2x32xf32>
    %130 = vector.extract_strided_slice %127 {offsets = [0, 32], sizes = [2, 32], strides = [1, 1]} : vector<2x128xf32> to vector<2x32xf32>
    %131 = vector.extract_strided_slice %128 {offsets = [0, 64], sizes = [2, 32], strides = [1, 1]} : vector<2x128xf32> to vector<2x32xf32>
    %132 = vector.extract_strided_slice %127 {offsets = [0, 96], sizes = [2, 32], strides = [1, 1]} : vector<2x128xf32> to vector<2x32xf32>
    %133 = arith.mulf %130, %99 : vector<2x32xf32>
    %134 = arith.mulf %129, %131 : vector<2x32xf32>
    %135 = arith.addf %133, %134 : vector<2x32xf32>
    %136 = math.tanh %135 : vector<2x32xf32>
    %137 = arith.mulf %132, %136 : vector<2x32xf32>
    %138 = tpu.concatenate %137, %119 in 1 : vector<2x32xf32>, vector<2x32xf32> -> vector<2x64xf32>
    %cst_26 = arith.constant dense<0.000000e+00> : vector<2x128xf32>
    %139 = tpu.matmul %138, %1, %cst_26 {dimension_numbers = #tpu.dot_dimension_numbers<[1], [0], [0], [1], [0, 0, 1, 1], [], []>} : vector<2x64xf32>, vector<64x128xf32>, vector<2x128xf32> -> vector<2x128xf32>
    %140 = arith.addf %139, %10 : vector<2x128xf32>
    %141 = arith.negf %140 : vector<2x128xf32>
    %142 = math.exp %141 : vector<2x128xf32>
    %cst_27 = arith.constant 1.000000e+00 : f32
    %143 = vector.broadcast %cst_27 : f32 to vector<2x128xf32>
    %144 = arith.addf %143, %142 : vector<2x128xf32>
    %145 = arith.divf %143, %144 : vector<2x128xf32>
    %146 = math.tanh %140 : vector<2x128xf32>
    %147 = vector.extract_strided_slice %145 {offsets = [0, 0], sizes = [2, 32], strides = [1, 1]} : vector<2x128xf32> to vector<2x32xf32>
    %148 = vector.extract_strided_slice %145 {offsets = [0, 32], sizes = [2, 32], strides = [1, 1]} : vector<2x128xf32> to vector<2x32xf32>
    %149 = vector.extract_strided_slice %146 {offsets = [0, 64], sizes = [2, 32], strides = [1, 1]} : vector<2x128xf32> to vector<2x32xf32>
    %150 = vector.extract_strided_slice %145 {offsets = [0, 96], sizes = [2, 32], strides = [1, 1]} : vector<2x128xf32> to vector<2x32xf32>
    %151 = arith.mulf %148, %117 : vector<2x32xf32>
    %152 = arith.mulf %147, %149 : vector<2x32xf32>
    %153 = arith.addf %151, %152 : vector<2x32xf32>
    %154 = math.tanh %153 : vector<2x32xf32>
    %155 = arith.mulf %150, %154 : vector<2x32xf32>
    %156 = vector.extract_strided_slice %7 {offsets = [8, 0], sizes = [2, 128], strides = [1, 1]} : vector<16x128xf32> to vector<2x128xf32>
    %cst_28 = arith.constant dense<0.000000e+00> : vector<2x128xf32>
    %157 = tpu.matmul %137, %0, %cst_28 {dimension_numbers = #tpu.dot_dimension_numbers<[1], [0], [0], [1], [0, 0, 1, 1], [], []>} : vector<2x32xf32>, vector<32x128xf32>, vector<2x128xf32> -> vector<2x128xf32>
    %158 = arith.addf %156, %157 : vector<2x128xf32>
    %159 = arith.negf %158 : vector<2x128xf32>
    %160 = math.exp %159 : vector<2x128xf32>
    %cst_29 = arith.constant 1.000000e+00 : f32
    %161 = vector.broadcast %cst_29 : f32 to vector<2x128xf32>
    %162 = arith.addf %161, %160 : vector<2x128xf32>
    %163 = arith.divf %161, %162 : vector<2x128xf32>
    %164 = math.tanh %158 : vector<2x128xf32>
    %165 = vector.extract_strided_slice %163 {offsets = [0, 0], sizes = [2, 32], strides = [1, 1]} : vector<2x128xf32> to vector<2x32xf32>
    %166 = vector.extract_strided_slice %163 {offsets = [0, 32], sizes = [2, 32], strides = [1, 1]} : vector<2x128xf32> to vector<2x32xf32>
    %167 = vector.extract_strided_slice %164 {offsets = [0, 64], sizes = [2, 32], strides = [1, 1]} : vector<2x128xf32> to vector<2x32xf32>
    %168 = vector.extract_strided_slice %163 {offsets = [0, 96], sizes = [2, 32], strides = [1, 1]} : vector<2x128xf32> to vector<2x32xf32>
    %169 = arith.mulf %166, %135 : vector<2x32xf32>
    %170 = arith.mulf %165, %167 : vector<2x32xf32>
    %171 = arith.addf %169, %170 : vector<2x32xf32>
    %172 = math.tanh %171 : vector<2x32xf32>
    %173 = arith.mulf %168, %172 : vector<2x32xf32>
    %174 = tpu.concatenate %173, %155 in 1 : vector<2x32xf32>, vector<2x32xf32> -> vector<2x64xf32>
    %cst_30 = arith.constant dense<0.000000e+00> : vector<2x128xf32>
    %175 = tpu.matmul %174, %1, %cst_30 {dimension_numbers = #tpu.dot_dimension_numbers<[1], [0], [0], [1], [0, 0, 1, 1], [], []>} : vector<2x64xf32>, vector<64x128xf32>, vector<2x128xf32> -> vector<2x128xf32>
    %176 = arith.addf %175, %10 : vector<2x128xf32>
    %177 = arith.negf %176 : vector<2x128xf32>
    %178 = math.exp %177 : vector<2x128xf32>
    %cst_31 = arith.constant 1.000000e+00 : f32
    %179 = vector.broadcast %cst_31 : f32 to vector<2x128xf32>
    %180 = arith.addf %179, %178 : vector<2x128xf32>
    %181 = arith.divf %179, %180 : vector<2x128xf32>
    %182 = math.tanh %176 : vector<2x128xf32>
    %183 = vector.extract_strided_slice %181 {offsets = [0, 0], sizes = [2, 32], strides = [1, 1]} : vector<2x128xf32> to vector<2x32xf32>
    %184 = vector.extract_strided_slice %181 {offsets = [0, 32], sizes = [2, 32], strides = [1, 1]} : vector<2x128xf32> to vector<2x32xf32>
    %185 = vector.extract_strided_slice %182 {offsets = [0, 64], sizes = [2, 32], strides = [1, 1]} : vector<2x128xf32> to vector<2x32xf32>
    %186 = vector.extract_strided_slice %181 {offsets = [0, 96], sizes = [2, 32], strides = [1, 1]} : vector<2x128xf32> to vector<2x32xf32>
    %187 = arith.mulf %184, %153 : vector<2x32xf32>
    %188 = arith.mulf %183, %185 : vector<2x32xf32>
    %189 = arith.addf %187, %188 : vector<2x32xf32>
    %190 = math.tanh %189 : vector<2x32xf32>
    %191 = arith.mulf %186, %190 : vector<2x32xf32>
    %192 = vector.extract_strided_slice %7 {offsets = [10, 0], sizes = [2, 128], strides = [1, 1]} : vector<16x128xf32> to vector<2x128xf32>
    %cst_32 = arith.constant dense<0.000000e+00> : vector<2x128xf32>
    %193 = tpu.matmul %173, %0, %cst_32 {dimension_numbers = #tpu.dot_dimension_numbers<[1], [0], [0], [1], [0, 0, 1, 1], [], []>} : vector<2x32xf32>, vector<32x128xf32>, vector<2x128xf32> -> vector<2x128xf32>
    %194 = arith.addf %192, %193 : vector<2x128xf32>
    %195 = arith.negf %194 : vector<2x128xf32>
    %196 = math.exp %195 : vector<2x128xf32>
    %cst_33 = arith.constant 1.000000e+00 : f32
    %197 = vector.broadcast %cst_33 : f32 to vector<2x128xf32>
    %198 = arith.addf %197, %196 : vector<2x128xf32>
    %199 = arith.divf %197, %198 : vector<2x128xf32>
    %200 = math.tanh %194 : vector<2x128xf32>
    %201 = vector.extract_strided_slice %199 {offsets = [0, 0], sizes = [2, 32], strides = [1, 1]} : vector<2x128xf32> to vector<2x32xf32>
    %202 = vector.extract_strided_slice %199 {offsets = [0, 32], sizes = [2, 32], strides = [1, 1]} : vector<2x128xf32> to vector<2x32xf32>
    %203 = vector.extract_strided_slice %200 {offsets = [0, 64], sizes = [2, 32], strides = [1, 1]} : vector<2x128xf32> to vector<2x32xf32>
    %204 = vector.extract_strided_slice %199 {offsets = [0, 96], sizes = [2, 32], strides = [1, 1]} : vector<2x128xf32> to vector<2x32xf32>
    %205 = arith.mulf %202, %171 : vector<2x32xf32>
    %206 = arith.mulf %201, %203 : vector<2x32xf32>
    %207 = arith.addf %205, %206 : vector<2x32xf32>
    %208 = math.tanh %207 : vector<2x32xf32>
    %209 = arith.mulf %204, %208 : vector<2x32xf32>
    %210 = tpu.concatenate %209, %191 in 1 : vector<2x32xf32>, vector<2x32xf32> -> vector<2x64xf32>
    %cst_34 = arith.constant dense<0.000000e+00> : vector<2x128xf32>
    %211 = tpu.matmul %210, %1, %cst_34 {dimension_numbers = #tpu.dot_dimension_numbers<[1], [0], [0], [1], [0, 0, 1, 1], [], []>} : vector<2x64xf32>, vector<64x128xf32>, vector<2x128xf32> -> vector<2x128xf32>
    %212 = arith.addf %211, %10 : vector<2x128xf32>
    %213 = arith.negf %212 : vector<2x128xf32>
    %214 = math.exp %213 : vector<2x128xf32>
    %cst_35 = arith.constant 1.000000e+00 : f32
    %215 = vector.broadcast %cst_35 : f32 to vector<2x128xf32>
    %216 = arith.addf %215, %214 : vector<2x128xf32>
    %217 = arith.divf %215, %216 : vector<2x128xf32>
    %218 = math.tanh %212 : vector<2x128xf32>
    %219 = vector.extract_strided_slice %217 {offsets = [0, 0], sizes = [2, 32], strides = [1, 1]} : vector<2x128xf32> to vector<2x32xf32>
    %220 = vector.extract_strided_slice %217 {offsets = [0, 32], sizes = [2, 32], strides = [1, 1]} : vector<2x128xf32> to vector<2x32xf32>
    %221 = vector.extract_strided_slice %218 {offsets = [0, 64], sizes = [2, 32], strides = [1, 1]} : vector<2x128xf32> to vector<2x32xf32>
    %222 = vector.extract_strided_slice %217 {offsets = [0, 96], sizes = [2, 32], strides = [1, 1]} : vector<2x128xf32> to vector<2x32xf32>
    %223 = arith.mulf %220, %189 : vector<2x32xf32>
    %224 = arith.mulf %219, %221 : vector<2x32xf32>
    %225 = arith.addf %223, %224 : vector<2x32xf32>
    %226 = math.tanh %225 : vector<2x32xf32>
    %227 = arith.mulf %222, %226 : vector<2x32xf32>
    %228 = vector.extract_strided_slice %7 {offsets = [12, 0], sizes = [2, 128], strides = [1, 1]} : vector<16x128xf32> to vector<2x128xf32>
    %cst_36 = arith.constant dense<0.000000e+00> : vector<2x128xf32>
    %229 = tpu.matmul %209, %0, %cst_36 {dimension_numbers = #tpu.dot_dimension_numbers<[1], [0], [0], [1], [0, 0, 1, 1], [], []>} : vector<2x32xf32>, vector<32x128xf32>, vector<2x128xf32> -> vector<2x128xf32>
    %230 = arith.addf %228, %229 : vector<2x128xf32>
    %231 = arith.negf %230 : vector<2x128xf32>
    %232 = math.exp %231 : vector<2x128xf32>
    %cst_37 = arith.constant 1.000000e+00 : f32
    %233 = vector.broadcast %cst_37 : f32 to vector<2x128xf32>
    %234 = arith.addf %233, %232 : vector<2x128xf32>
    %235 = arith.divf %233, %234 : vector<2x128xf32>
    %236 = math.tanh %230 : vector<2x128xf32>
    %237 = vector.extract_strided_slice %235 {offsets = [0, 0], sizes = [2, 32], strides = [1, 1]} : vector<2x128xf32> to vector<2x32xf32>
    %238 = vector.extract_strided_slice %235 {offsets = [0, 32], sizes = [2, 32], strides = [1, 1]} : vector<2x128xf32> to vector<2x32xf32>
    %239 = vector.extract_strided_slice %236 {offsets = [0, 64], sizes = [2, 32], strides = [1, 1]} : vector<2x128xf32> to vector<2x32xf32>
    %240 = vector.extract_strided_slice %235 {offsets = [0, 96], sizes = [2, 32], strides = [1, 1]} : vector<2x128xf32> to vector<2x32xf32>
    %241 = arith.mulf %238, %207 : vector<2x32xf32>
    %242 = arith.mulf %237, %239 : vector<2x32xf32>
    %243 = arith.addf %241, %242 : vector<2x32xf32>
    %244 = math.tanh %243 : vector<2x32xf32>
    %245 = arith.mulf %240, %244 : vector<2x32xf32>
    %246 = tpu.concatenate %245, %227 in 1 : vector<2x32xf32>, vector<2x32xf32> -> vector<2x64xf32>
    %cst_38 = arith.constant dense<0.000000e+00> : vector<2x128xf32>
    %247 = tpu.matmul %246, %1, %cst_38 {dimension_numbers = #tpu.dot_dimension_numbers<[1], [0], [0], [1], [0, 0, 1, 1], [], []>} : vector<2x64xf32>, vector<64x128xf32>, vector<2x128xf32> -> vector<2x128xf32>
    %248 = arith.addf %247, %10 : vector<2x128xf32>
    %249 = arith.negf %248 : vector<2x128xf32>
    %250 = math.exp %249 : vector<2x128xf32>
    %cst_39 = arith.constant 1.000000e+00 : f32
    %251 = vector.broadcast %cst_39 : f32 to vector<2x128xf32>
    %252 = arith.addf %251, %250 : vector<2x128xf32>
    %253 = arith.divf %251, %252 : vector<2x128xf32>
    %254 = math.tanh %248 : vector<2x128xf32>
    %255 = vector.extract_strided_slice %253 {offsets = [0, 0], sizes = [2, 32], strides = [1, 1]} : vector<2x128xf32> to vector<2x32xf32>
    %256 = vector.extract_strided_slice %253 {offsets = [0, 32], sizes = [2, 32], strides = [1, 1]} : vector<2x128xf32> to vector<2x32xf32>
    %257 = vector.extract_strided_slice %254 {offsets = [0, 64], sizes = [2, 32], strides = [1, 1]} : vector<2x128xf32> to vector<2x32xf32>
    %258 = vector.extract_strided_slice %253 {offsets = [0, 96], sizes = [2, 32], strides = [1, 1]} : vector<2x128xf32> to vector<2x32xf32>
    %259 = arith.mulf %256, %225 : vector<2x32xf32>
    %260 = arith.mulf %255, %257 : vector<2x32xf32>
    %261 = arith.addf %259, %260 : vector<2x32xf32>
    %262 = math.tanh %261 : vector<2x32xf32>
    %263 = arith.mulf %258, %262 : vector<2x32xf32>
    %264 = vector.extract_strided_slice %7 {offsets = [14, 0], sizes = [2, 128], strides = [1, 1]} : vector<16x128xf32> to vector<2x128xf32>
    %cst_40 = arith.constant dense<0.000000e+00> : vector<2x128xf32>
    %265 = tpu.matmul %245, %0, %cst_40 {dimension_numbers = #tpu.dot_dimension_numbers<[1], [0], [0], [1], [0, 0, 1, 1], [], []>} : vector<2x32xf32>, vector<32x128xf32>, vector<2x128xf32> -> vector<2x128xf32>
    %266 = arith.addf %264, %265 : vector<2x128xf32>
    %267 = arith.negf %266 : vector<2x128xf32>
    %268 = math.exp %267 : vector<2x128xf32>
    %cst_41 = arith.constant 1.000000e+00 : f32
    %269 = vector.broadcast %cst_41 : f32 to vector<2x128xf32>
    %270 = arith.addf %269, %268 : vector<2x128xf32>
    %271 = arith.divf %269, %270 : vector<2x128xf32>
    %272 = math.tanh %266 : vector<2x128xf32>
    %273 = vector.extract_strided_slice %271 {offsets = [0, 0], sizes = [2, 32], strides = [1, 1]} : vector<2x128xf32> to vector<2x32xf32>
    %274 = vector.extract_strided_slice %271 {offsets = [0, 32], sizes = [2, 32], strides = [1, 1]} : vector<2x128xf32> to vector<2x32xf32>
    %275 = vector.extract_strided_slice %272 {offsets = [0, 64], sizes = [2, 32], strides = [1, 1]} : vector<2x128xf32> to vector<2x32xf32>
    %276 = vector.extract_strided_slice %271 {offsets = [0, 96], sizes = [2, 32], strides = [1, 1]} : vector<2x128xf32> to vector<2x32xf32>
    %277 = arith.mulf %274, %243 : vector<2x32xf32>
    %278 = arith.mulf %273, %275 : vector<2x32xf32>
    %279 = arith.addf %277, %278 : vector<2x32xf32>
    %280 = math.tanh %279 : vector<2x32xf32>
    %281 = arith.mulf %276, %280 : vector<2x32xf32>
    %282 = tpu.concatenate %281, %263 in 1 : vector<2x32xf32>, vector<2x32xf32> -> vector<2x64xf32>
    %cst_42 = arith.constant dense<0.000000e+00> : vector<2x128xf32>
    %283 = tpu.matmul %282, %1, %cst_42 {dimension_numbers = #tpu.dot_dimension_numbers<[1], [0], [0], [1], [0, 0, 1, 1], [], []>} : vector<2x64xf32>, vector<64x128xf32>, vector<2x128xf32> -> vector<2x128xf32>
    %284 = arith.addf %283, %10 : vector<2x128xf32>
    %285 = arith.negf %284 : vector<2x128xf32>
    %286 = math.exp %285 : vector<2x128xf32>
    %cst_43 = arith.constant 1.000000e+00 : f32
    %287 = vector.broadcast %cst_43 : f32 to vector<2x128xf32>
    %288 = arith.addf %287, %286 : vector<2x128xf32>
    %289 = arith.divf %287, %288 : vector<2x128xf32>
    %290 = math.tanh %284 : vector<2x128xf32>
    %291 = vector.extract_strided_slice %289 {offsets = [0, 0], sizes = [2, 32], strides = [1, 1]} : vector<2x128xf32> to vector<2x32xf32>
    %292 = vector.extract_strided_slice %289 {offsets = [0, 32], sizes = [2, 32], strides = [1, 1]} : vector<2x128xf32> to vector<2x32xf32>
    %293 = vector.extract_strided_slice %290 {offsets = [0, 64], sizes = [2, 32], strides = [1, 1]} : vector<2x128xf32> to vector<2x32xf32>
    %294 = vector.extract_strided_slice %289 {offsets = [0, 96], sizes = [2, 32], strides = [1, 1]} : vector<2x128xf32> to vector<2x32xf32>
    %295 = arith.mulf %292, %261 : vector<2x32xf32>
    %296 = arith.mulf %291, %293 : vector<2x32xf32>
    %297 = arith.addf %295, %296 : vector<2x32xf32>
    %298 = math.tanh %297 : vector<2x32xf32>
    %299 = arith.mulf %294, %298 : vector<2x32xf32>
    %c0_44 = arith.constant 0 : index
    %c0_45 = arith.constant 0 : index
    %300 = vector.load %arg6[%c0_44, %c0_45] : memref<32x4xf32, #tpu.memory_space<vmem>>, vector<32x4xf32>
    %cst_46 = arith.constant dense<0.000000e+00> : vector<2x4xf32>
    %301 = tpu.matmul %299, %300, %cst_46 {dimension_numbers = #tpu.dot_dimension_numbers<[1], [0], [0], [1], [0, 0, 1, 1], [], []>} : vector<2x32xf32>, vector<32x4xf32>, vector<2x4xf32> -> vector<2x4xf32>
    %c0_47 = arith.constant 0 : index
    %c0_48 = arith.constant 0 : index
    %302 = vector.load %arg7[%c0_47, %c0_48] : memref<1x4xf32, #tpu.memory_space<vmem>>, vector<1x4xf32>
    %303 = vector.broadcast %302 : vector<1x4xf32> to vector<2x4xf32>
    %304 = arith.addf %301, %303 : vector<2x4xf32>
    %c0_49 = arith.constant 0 : index
    %c0_50 = arith.constant 0 : index
    %305 = vector.load %arg8[%c0_49, %c0_50] : memref<2x4xf32, #tpu.memory_space<vmem>>, vector<2x4xf32>
    tpu.vector_store %arg8[%c0_49, %c0_50], %304 {strides = array<i32>} : memref<2x4xf32, #tpu.memory_space<vmem>>, vector<2x4xf32>,
    return
  }
}

</mosaic_0001>

<llo_original>
// kernel: tpu_custom_call.1
$region0: #{tpu_custom_call.1}
  #allocation0 [shape = 'u32[]', space=smem, size = 0x4, offset = 0x4, fixed_abs, tag = 'smem constant byte address 0x4 - core index']
  #allocation1 [shape = 'u32[72,128]{1,0:T(1,128)}', space=vmem, size = 0x9000, scoped, tag = 'internal scratch']
  %s0 = inlined_call_operand.vmem [shape: f32[16,4], index: 0, kind: input, shape index: {}]
  %s1 = inlined_call_operand.vmem [shape: f32[4,128], index: 1, kind: input, shape index: {}]
  %s2 = inlined_call_operand.vmem [shape: f32[32,128], index: 2, kind: input, shape index: {}]
  %s3 = inlined_call_operand.vmem [shape: f32[1,128], index: 3, kind: input, shape index: {}]
  %s4 = inlined_call_operand.hbm [shape: f32[64,128], index: 4, kind: input, shape index: {}]
  %s5 = inlined_call_operand.vmem [shape: f32[1,128], index: 5, kind: input, shape index: {}]
  %s6 = inlined_call_operand.vmem [shape: f32[32,4], index: 6, kind: input, shape index: {}]
  %s7 = inlined_call_operand.vmem [shape: f32[1,4], index: 7, kind: input, shape index: {}]
  %s8 = inlined_call_operand.hbm [shape: f32[2,4], index: 8, kind: output, shape index: {}]
  %s9 = sld [smem:[#allocation0]]
  $region46: #{tpu_custom_call.1} parent=0
    _
  %s11 = ssub.s32 1, %s9
  %s12 = scalar_select 0, %s11, %s9
  $region1: #{tpu_custom_call.1} parent=0
    #allocation2 [shape = 'u8[32768]{0}', space=vmem, size = 0x8000, scoped, tag = 'input window, operand 4, single buffered']
    #allocation3 [shape = 's32[1]{0}', space=sflag, size = 0x4, scoped, tag = 'scoped memory for tpu_custom_call.1']
    #allocation4 [shape = 's32[1]{0}', space=sflag, size = 0x4, scoped, tag = 'scoped memory for tpu_custom_call.1']
    #allocation5 [shape = 'u8[1024]{0}', space=vmem, size = 0x400, scoped, tag = 'output window, operand 0, single buffered']
    %13 = vsyncpa [#allocation3], 0
    %14 = vsyncpa [#allocation4], 0
    // Predicated region
    $region2: #{tpu_custom_call.1} parent=1 // pred_check
      _
    $region3: #{tpu_custom_call.1} parent=1 // pred_check_branch
      %16 = sbr.rel (0) target = $region5
    $region4: #{tpu_custom_call.1} parent=1 // pred_region
      _
    $region5: #{tpu_custom_call.1} parent=1 // pred_fallthru
      _
    // Predicated region
    $region6: #{tpu_custom_call.1} parent=1 // pred_check
      _
    $region7: #{tpu_custom_call.1} parent=1 // pred_check_branch
      %18 = sbr.rel (0) target = $region9
    $region8: #{tpu_custom_call.1} parent=1 // pred_region
      _
    $region9: #{tpu_custom_call.1} parent=1 // pred_fallthru
      _
    // Predicated region
    $region10: #{tpu_custom_call.1} parent=1 // pred_check
      _
    $region11: #{tpu_custom_call.1} parent=1 // pred_check_branch
      %20 = sbr.rel (0) target = $region13
    $region12: #{tpu_custom_call.1} parent=1 // pred_region
      _
    $region13: #{tpu_custom_call.1} parent=1 // pred_fallthru
      _
    // Predicated region
    $region14: #{tpu_custom_call.1} parent=1 // pred_check
      _
    $region15: #{tpu_custom_call.1} parent=1 // pred_check_branch
      %22 = sbr.rel (0) target = $region17
    $region16: #{tpu_custom_call.1} parent=1 // pred_region
      _
    $region17: #{tpu_custom_call.1} parent=1 // pred_fallthru
      _
    // Predicated region
    $region18: #{tpu_custom_call.1} parent=1 // pred_check
      _
    $region19: #{tpu_custom_call.1} parent=1 // pred_check_branch
      %24 = sbr.rel (0) target = $region21
    $region20: #{tpu_custom_call.1} parent=1 // pred_region
      %26 = vsyncadd [#allocation3], 0
      %s27 = sshll.u32 %s4, 4
      %s28 = int_to_ptr.hbm [resolvable:$true] %s27
      %s29 = sshll.u32 [#allocation2], 4
      %s30 = int_to_ptr.vmem [resolvable:$true] %s29
      %35 = dma.hbm_to_vmem [thread:$0]  %s28, 1024, %s30, [#allocation3], 128, 128, 8
    $region21: #{tpu_custom_call.1} parent=1 // pred_fallthru
      _
    // Predicated region
    $region22: #{tpu_custom_call.1} parent=1 // pred_check
      _
    $region23: #{tpu_custom_call.1} parent=1 // pred_check_branch
      %37 = sbr.rel (0) target = $region25
    $region24: #{tpu_custom_call.1} parent=1 // pred_region
      _
    $region25: #{tpu_custom_call.1} parent=1 // pred_fallthru
      _
    // Predicated region
    $region26: #{tpu_custom_call.1} parent=1 // pred_check
      _
    $region27: #{tpu_custom_call.1} parent=1 // pred_check_branch
      %39 = sbr.rel (0) target = $region29
    $region28: #{tpu_custom_call.1} parent=1 // pred_region
      _
    $region29: #{tpu_custom_call.1} parent=1 // pred_fallthru
      _
    // Predicated region
    $region30: #{tpu_custom_call.1} parent=1 // pred_check
      _
    $region31: #{tpu_custom_call.1} parent=1 // pred_check_branch
      %41 = sbr.rel (0) target = $region33
    $region32: #{tpu_custom_call.1} parent=1 // pred_region
      _
    $region33: #{tpu_custom_call.1} parent=1 // pred_fallthru
      _
    // Predicated region
    $region34: #{tpu_custom_call.1} parent=1 // pred_check
      _
    $region35: #{tpu_custom_call.1} parent=1 // pred_check_branch
      %43 = sbr.rel (0) target = $region37
    $region36: #{tpu_custom_call.1} parent=1 // pred_region
      %45 = dma.done [#allocation3], 1024
    $region37: #{tpu_custom_call.1} parent=1 // pred_fallthru
      _
    %v46 = vld [vmem:[%s2] sm:$0xff]
    %v47 = vld [vmem:[%s2 + $0x8] sm:$0xff]
    %v48 = vld [vmem:[%s2 + $0x10] sm:$0xff]
    %v49 = vld [vmem:[%s2 + $0x18] sm:$0xff]
    %v50 = vld [vmem:[#allocation2] sm:$0xff]
    %v51 = vld [vmem:[#allocation2 + $0x8] sm:$0xff]
    %v52 = vld [vmem:[#allocation2 + $0x10] sm:$0xff]
    %v53 = vld [vmem:[#allocation2 + $0x18] sm:$0xff]
    %v54 = vld [vmem:[#allocation2 + $0x20] sm:$0xff]
    %v55 = vld [vmem:[#allocation2 + $0x28] sm:$0xff]
    %v56 = vld [vmem:[#allocation2 + $0x30] sm:$0xff]
    %v57 = vld [vmem:[#allocation2 + $0x38] sm:$0xff]
    %v58 = vld [vmem:[%s0] sm:$0xff]
    %v59 = vld [vmem:[%s0 + $0x8] sm:$0xff]
    %v60 = vld [vmem:[%s1] sm:$0xf]
    %v61 = vld [vmem:[%s3] sm:$0x1]
    %v63 = vperm.slane %v61, 0
    %vm65 = vcmask 31744
    %v67 = vsel %vm65, %v58, 0
    %v70 = vsel %vm65, %v59, 0
    %vm72 = vcmask 1043456
    %v74 = vsel %vm72, %v60, 0
    %76 = vmatpush.msra.mxu0 0.0
    %77 = vmatpush.msra.mxu0 0.0
    %78 = vmatpush.msra.mxu0 0.0
    %79 = vmatpush.msra.mxu0 0.0
    %80 = vmatpush.msra.mxu0 0.0
    %81 = vmatpush.msra.mxu0 0.0
    %82 = vmatpush.msra.mxu0 0.0
    %83 = vmatpush.msra.mxu0 0.0
    %84 = vmatpush.msra.mxu0 0.0
    %85 = vmatpush.msra.mxu0 0.0
    %86 = vmatpush.msra.mxu0 0.0
    %87 = vmatpush.msra.mxu0 0.0
    %88 = vmatpush.msra.mxu0 0.0
    %89 = vmatpush.msra.mxu0 0.0
    %90 = vmatpush.msra.mxu0 0.0
    %91 = vmatpush.msra.mxu0 %v74
    %92 = vmatmul.f32.gmra.mxu0 %v67
    %v93 = vpop.f32.mrf.mxu0
    %v94 = vadd.f32 %v63, %v93
    %95 = vmatmul.f32.gmra.mxu0 %v70
    %v96 = vpop.f32.mrf.mxu0
    %v97 = vadd.f32 %v63, %v96
    %98 = vdwg.mxu0
    %v99 = vld [vmem:[%s5] sm:$0x1]
    %v101 = vperm.slane %v99, 0
    %vm103 = vcmask 261120
    %v105 = vsel %vm103, 0.0, 0
    %107 = vmatpush.msra.mxu0 0.0
    %108 = vmatpush.msra.mxu0 0.0
    %109 = vmatpush.msra.mxu0 0.0
    %110 = vmatpush.msra.mxu0 0.0
    %111 = vmatpush.msra.mxu0 0.0
    %112 = vmatpush.msra.mxu0 0.0
    %113 = vmatpush.msra.mxu0 0.0
    %114 = vmatpush.msra.mxu0 0.0
    %115 = vmatpush.msra.mxu0 0.0
    %116 = vmatpush.msra.mxu0 0.0
    %117 = vmatpush.msra.mxu0 0.0
    %118 = vmatpush.msra.mxu0 0.0
    %119 = vmatpush.msra.mxu0 %v49
    %120 = vmatpush.msra.mxu0 %v48
    %121 = vmatpush.msra.mxu0 %v47
    %122 = vmatpush.msra.mxu0 %v46
    %123 = vmatmul.f32.gmra.mxu0 %v105
    %v124 = vpop.f32.mrf.mxu0
    %v125 = vadd.f32 0.0, %v124
    %126 = vdwg.mxu0
    %v127 = vadd.f32 %v94, %v125
    %v128 = vxor.u32 %v127, 2147483648
    %v129 = vmul.f32 %v128, 1.442695
    %v130 = vpow.pop %v129
    %v131 = vadd.f32 %v130, 1.0
    %v132 = vrcp.pop %v131
    %v133 = vmul.f32 %v131, %v132
    %v134 = vsub.f32 1.0, %v133
    %v135 = vmul.f32 %v132, %v134
    %v136 = vadd.f32 %v132, %v135
    %vm137 = vweird.f32 %v131
    %vm138 = vweird.f32 %v132
    %vm139 = vmor %vm137, %vm138
    %v140 = vsel %vm139, %v132, %v136
    %v141 = vand.u32 2147483647, %v131
    %vm142 = vcmp.eq.f32.partialorder %v141, 8.507059e+37
    %v143 = vand.u32 %v131, 2147483648
    %v144 = vor.u32 1.1754944e-38, %v143
    %v145 = vsel %vm142, %v144, %v140
    %v146 = vmul.f32 1.0, %v145
    %v147 = vtanh.pop %v127
    %v148 = vmul.f32 %v146, 0.0
    %150 = vrot.lane.b32.xlu0 %v147, 64
    %v151 = vpop.permute.xlu0 %150
    %v153 = vmul.f32 %v146, %v151
    %155 = vrot.lane.b32.xlu0 %v153, 32
    %v156 = vpop.permute.xlu0 %155
    %v158 = vadd.f32 %v148, %v156
    %v159 = vtanh.pop %v158
    %161 = vrot.lane.b32.xlu0 %v159, 64
    %v162 = vpop.permute.xlu0 %161
    %v164 = vmul.f32 %v146, %v162
    %166 = vrot.lane.b32.xlu0 %v164, 32
    %v167 = vpop.permute.xlu0 %166
    %v169 = vsel %vm103, %v167, 0.0
    %vm170 = vcmask 523264
    %v172 = vsel %vm170, %v169, 0
    %174 = vmatpush.msra.mxu0 0.0
    %175 = vmatpush.msra.mxu0 0.0
    %176 = vmatpush.msra.mxu0 0.0
    %177 = vmatpush.msra.mxu0 0.0
    %178 = vmatpush.msra.mxu0 0.0
    %179 = vmatpush.msra.mxu0 0.0
    %180 = vmatpush.msra.mxu0 0.0
    %181 = vmatpush.msra.mxu0 0.0
    %182 = vmatpush.msra.mxu0 %v57
    %183 = vmatpush.msra.mxu0 %v56
    %184 = vmatpush.msra.mxu0 %v55
    %185 = vmatpush.msra.mxu0 %v54
    %186 = vmatpush.msra.mxu0 %v53
    %187 = vmatpush.msra.mxu0 %v52
    %188 = vmatpush.msra.mxu0 %v51
    %189 = vmatpush.msra.mxu0 %v50
    %190 = vmatmul.f32.gmra.mxu0 %v172
    %v191 = vpop.f32.mrf.mxu0
    %v192 = vadd.f32 %v101, %v191
    %193 = vdwg.mxu0
    %v194 = vxor.u32 %v192, 2147483648
    %v195 = vmul.f32 %v194, 1.442695
    %v196 = vpow.pop %v195
    %v197 = vadd.f32 %v196, 1.0
    %v198 = vrcp.pop %v197
    %v199 = vmul.f32 %v197, %v198
    %v200 = vsub.f32 1.0, %v199
    %v201 = vmul.f32 %v198, %v200
    %v202 = vadd.f32 %v198, %v201
    %vm203 = vweird.f32 %v197
    %vm204 = vweird.f32 %v198
    %vm205 = vmor %vm203, %vm204
    %v206 = vsel %vm205, %v198, %v202
    %v207 = vand.u32 2147483647, %v197
    %vm208 = vcmp.eq.f32.partialorder %v207, 8.507059e+37
    %v209 = vand.u32 %v197, 2147483648
    %v210 = vor.u32 1.1754944e-38, %v209
    %v211 = vsel %vm208, %v210, %v206
    %v212 = vmul.f32 1.0, %v211
    %v213 = vtanh.pop %v192
    %v214 = vmul.f32 %v212, 0.0
    %216 = vrot.lane.b32.xlu0 %v213, 64
    %v217 = vpop.permute.xlu0 %216
    %v219 = vmul.f32 %v212, %v217
    %221 = vrot.lane.b32.xlu0 %v219, 32
    %v222 = vpop.permute.xlu0 %221
    %v224 = vadd.f32 %v214, %v222
    %v225 = vtanh.pop %v224
    %227 = vrot.lane.b32.xlu0 %v225, 64
    %v228 = vpop.permute.xlu0 %227
    %v230 = vmul.f32 %v212, %v228
    %v231 = vsel %vm103, %v167, 0
    %233 = vmatpush.msra.mxu0 0.0
    %234 = vmatpush.msra.mxu0 0.0
    %235 = vmatpush.msra.mxu0 0.0
    %236 = vmatpush.msra.mxu0 0.0
    %237 = vmatpush.msra.mxu0 0.0
    %238 = vmatpush.msra.mxu0 0.0
    %239 = vmatpush.msra.mxu0 0.0
    %240 = vmatpush.msra.mxu0 0.0
    %241 = vmatpush.msra.mxu0 0.0
    %242 = vmatpush.msra.mxu0 0.0
    %243 = vmatpush.msra.mxu0 0.0
    %244 = vmatpush.msra.mxu0 0.0
    %245 = vmatpush.msra.mxu0 %v49
    %246 = vmatpush.msra.mxu0 %v48
    %247 = vmatpush.msra.mxu0 %v47
    %248 = vmatpush.msra.mxu0 %v46
    %249 = vmatmul.f32.gmra.mxu0 %v231
    %v250 = vpop.f32.mrf.mxu0
    %v251 = vadd.f32 0.0, %v250
    %252 = vdwg.mxu0
    %v254 = vrot.slane %v251, 6
    %v256 = vadd.f32 %v94, %v254
    %v257 = vxor.u32 %v256, 2147483648
    %v258 = vmul.f32 %v257, 1.442695
    %v259 = vpow.pop %v258
    %v260 = vadd.f32 %v259, 1.0
    %v261 = vrcp.pop %v260
    %v262 = vmul.f32 %v260, %v261
    %v263 = vsub.f32 1.0, %v262
    %v264 = vmul.f32 %v261, %v263
    %v265 = vadd.f32 %v261, %v264
    %vm266 = vweird.f32 %v260
    %vm267 = vweird.f32 %v261
    %vm268 = vmor %vm266, %vm267
    %v269 = vsel %vm268, %v261, %v265
    %v270 = vand.u32 2147483647, %v260
    %vm271 = vcmp.eq.f32.partialorder %v270, 8.507059e+37
    %v272 = vand.u32 %v260, 2147483648
    %v273 = vor.u32 1.1754944e-38, %v272
    %v274 = vsel %vm271, %v273, %v269
    %v275 = vmul.f32 1.0, %v274
    %v276 = vtanh.pop %v256
    %v278 = vrot.slane %v158, 6
    %v280 = vmul.f32 %v275, %v278
    %282 = vrot.lane.b32.xlu0 %v276, 64
    %v283 = vpop.permute.xlu0 %282
    %v285 = vmul.f32 %v275, %v283
    %287 = vrot.lane.b32.xlu0 %v285, 32
    %v288 = vpop.permute.xlu0 %287
    %v290 = vadd.f32 %v280, %v288
    %v291 = vtanh.pop %v290
    %293 = vrot.lane.b32.xlu0 %v291, 64
    %v294 = vpop.permute.xlu0 %293
    %v296 = vmul.f32 %v275, %v294
    %298 = vrot.lane.b32.xlu0 %v296, 32
    %v299 = vpop.permute.xlu0 %298
    %v302 = vrot.slane %v230, 6
    %303 = vrot.lane.b32.xlu0 %v302, 64
    %v304 = vpop.permute.xlu0 %303
    %v306 = vsel %vm103, %v299, %v304
    %v308 = vrot.slane %v306, 2
    %v309 = vsel %vm170, %v308, 0
    %311 = vmatpush.msra.mxu0 0.0
    %312 = vmatpush.msra.mxu0 0.0
    %313 = vmatpush.msra.mxu0 0.0
    %314 = vmatpush.msra.mxu0 0.0
    %315 = vmatpush.msra.mxu0 0.0
    %316 = vmatpush.msra.mxu0 0.0
    %317 = vmatpush.msra.mxu0 0.0
    %318 = vmatpush.msra.mxu0 0.0
    %319 = vmatpush.msra.mxu0 %v57
    %320 = vmatpush.msra.mxu0 %v56
    %321 = vmatpush.msra.mxu0 %v55
    %322 = vmatpush.msra.mxu0 %v54
    %323 = vmatpush.msra.mxu0 %v53
    %324 = vmatpush.msra.mxu0 %v52
    %325 = vmatpush.msra.mxu0 %v51
    %326 = vmatpush.msra.mxu0 %v50
    %327 = vmatmul.f32.gmra.mxu0 %v309
    %v328 = vpop.f32.mrf.mxu0
    %v329 = vadd.f32 %v101, %v328
    %330 = vdwg.mxu0
    %v331 = vxor.u32 %v329, 2147483648
    %v332 = vmul.f32 %v331, 1.442695
    %v333 = vpow.pop %v332
    %v334 = vadd.f32 %v333, 1.0
    %v335 = vrcp.pop %v334
    %v336 = vmul.f32 %v334, %v335
    %v337 = vsub.f32 1.0, %v336
    %v338 = vmul.f32 %v335, %v337
    %v339 = vadd.f32 %v335, %v338
    %vm340 = vweird.f32 %v334
    %vm341 = vweird.f32 %v335
    %vm342 = vmor %vm340, %vm341
    %v343 = vsel %vm342, %v335, %v339
    %v344 = vand.u32 2147483647, %v334
    %vm345 = vcmp.eq.f32.partialorder %v344, 8.507059e+37
    %v346 = vand.u32 %v334, 2147483648
    %v347 = vor.u32 1.1754944e-38, %v346
    %v348 = vsel %vm345, %v347, %v343
    %v349 = vmul.f32 1.0, %v348
    %v350 = vtanh.pop %v329
    %v351 = vmul.f32 %v349, %v224
    %353 = vrot.lane.b32.xlu0 %v350, 64
    %v354 = vpop.permute.xlu0 %353
    %v356 = vmul.f32 %v349, %v354
    %358 = vrot.lane.b32.xlu0 %v356, 32
    %v359 = vpop.permute.xlu0 %358
    %v361 = vadd.f32 %v351, %v359
    %v362 = vtanh.pop %v361
    %364 = vrot.lane.b32.xlu0 %v362, 64
    %v365 = vpop.permute.xlu0 %364
    %v367 = vmul.f32 %v349, %v365
    %v368 = vrot.slane %v296, 2
    %369 = vrot.lane.b32.xlu0 %v368, 32
    %v370 = vpop.permute.xlu0 %369
    %v371 = vsel %vm103, %v370, 0
    %373 = vmatpush.msra.mxu0 0.0
    %374 = vmatpush.msra.mxu0 0.0
    %375 = vmatpush.msra.mxu0 0.0
    %376 = vmatpush.msra.mxu0 0.0
    %377 = vmatpush.msra.mxu0 0.0
    %378 = vmatpush.msra.mxu0 0.0
    %379 = vmatpush.msra.mxu0 0.0
    %380 = vmatpush.msra.mxu0 0.0
    %381 = vmatpush.msra.mxu0 0.0
    %382 = vmatpush.msra.mxu0 0.0
    %383 = vmatpush.msra.mxu0 0.0
    %384 = vmatpush.msra.mxu0 0.0
    %385 = vmatpush.msra.mxu0 %v49
    %386 = vmatpush.msra.mxu0 %v48
    %387 = vmatpush.msra.mxu0 %v47
    %388 = vmatpush.msra.mxu0 %v46
    %389 = vmatmul.f32.gmra.mxu0 %v371
    %v390 = vpop.f32.mrf.mxu0
    %v391 = vadd.f32 0.0, %v390
    %392 = vdwg.mxu0
    %v394 = vrot.slane %v391, 4
    %v396 = vadd.f32 %v94, %v394
    %v397 = vxor.u32 %v396, 2147483648
    %v398 = vmul.f32 %v397, 1.442695
    %v399 = vpow.pop %v398
    %v400 = vadd.f32 %v399, 1.0
    %v401 = vrcp.pop %v400
    %v402 = vmul.f32 %v400, %v401
    %v403 = vsub.f32 1.0, %v402
    %v404 = vmul.f32 %v401, %v403
    %v405 = vadd.f32 %v401, %v404
    %vm406 = vweird.f32 %v400
    %vm407 = vweird.f32 %v401
    %vm408 = vmor %vm406, %vm407
    %v409 = vsel %vm408, %v401, %v405
    %v410 = vand.u32 2147483647, %v400
    %vm411 = vcmp.eq.f32.partialorder %v410, 8.507059e+37
    %v412 = vand.u32 %v400, 2147483648
    %v413 = vor.u32 1.1754944e-38, %v412
    %v414 = vsel %vm411, %v413, %v409
    %v415 = vmul.f32 1.0, %v414
    %v416 = vtanh.pop %v396
    %v418 = vrot.slane %v290, 6
    %v420 = vmul.f32 %v415, %v418
    %422 = vrot.lane.b32.xlu0 %v416, 64
    %v423 = vpop.permute.xlu0 %422
    %v425 = vmul.f32 %v415, %v423
    %427 = vrot.lane.b32.xlu0 %v425, 32
    %v428 = vpop.permute.xlu0 %427
    %v430 = vadd.f32 %v420, %v428
    %v431 = vtanh.pop %v430
    %433 = vrot.lane.b32.xlu0 %v431, 64
    %v434 = vpop.permute.xlu0 %433
    %v436 = vmul.f32 %v415, %v434
    %438 = vrot.lane.b32.xlu0 %v436, 32
    %v439 = vpop.permute.xlu0 %438
    %v442 = vrot.slane %v367, 4
    %443 = vrot.lane.b32.xlu0 %v442, 64
    %v444 = vpop.permute.xlu0 %443
    %v446 = vsel %vm103, %v439, %v444
    %v448 = vrot.slane %v446, 4
    %v449 = vsel %vm170, %v448, 0
    %451 = vmatpush.msra.mxu0 0.0
    %452 = vmatpush.msra.mxu0 0.0
    %453 = vmatpush.msra.mxu0 0.0
    %454 = vmatpush.msra.mxu0 0.0
    %455 = vmatpush.msra.mxu0 0.0
    %456 = vmatpush.msra.mxu0 0.0
    %457 = vmatpush.msra.mxu0 0.0
    %458 = vmatpush.msra.mxu0 0.0
    %459 = vmatpush.msra.mxu0 %v57
    %460 = vmatpush.msra.mxu0 %v56
    %461 = vmatpush.msra.mxu0 %v55
    %462 = vmatpush.msra.mxu0 %v54
    %463 = vmatpush.msra.mxu0 %v53
    %464 = vmatpush.msra.mxu0 %v52
    %465 = vmatpush.msra.mxu0 %v51
    %466 = vmatpush.msra.mxu0 %v50
    %467 = vmatmul.f32.gmra.mxu0 %v449
    %v468 = vpop.f32.mrf.mxu0
    %v469 = vadd.f32 %v101, %v468
    %470 = vdwg.mxu0
    %v471 = vxor.u32 %v469, 2147483648
    %v472 = vmul.f32 %v471, 1.442695
    %v473 = vpow.pop %v472
    %v474 = vadd.f32 %v473, 1.0
    %v475 = vrcp.pop %v474
    %v476 = vmul.f32 %v474, %v475
    %v477 = vsub.f32 1.0, %v476
    %v478 = vmul.f32 %v475, %v477
    %v479 = vadd.f32 %v475, %v478
    %vm480 = vweird.f32 %v474
    %vm481 = vweird.f32 %v475
    %vm482 = vmor %vm480, %vm481
    %v483 = vsel %vm482, %v475, %v479
    %v484 = vand.u32 2147483647, %v474
    %vm485 = vcmp.eq.f32.partialorder %v484, 8.507059e+37
    %v486 = vand.u32 %v474, 2147483648
    %v487 = vor.u32 1.1754944e-38, %v486
    %v488 = vsel %vm485, %v487, %v483
    %v489 = vmul.f32 1.0, %v488
    %v490 = vtanh.pop %v469
    %v491 = vmul.f32 %v489, %v361
    %493 = vrot.lane.b32.xlu0 %v490, 64
    %v494 = vpop.permute.xlu0 %493
    %v496 = vmul.f32 %v489, %v494
    %498 = vrot.lane.b32.xlu0 %v496, 32
    %v499 = vpop.permute.xlu0 %498
    %v501 = vadd.f32 %v491, %v499
    %v502 = vtanh.pop %v501
    %504 = vrot.lane.b32.xlu0 %v502, 64
    %v505 = vpop.permute.xlu0 %504
    %v507 = vmul.f32 %v489, %v505
    %v508 = vrot.slane %v436, 4
    %509 = vrot.lane.b32.xlu0 %v508, 32
    %v510 = vpop.permute.xlu0 %509
    %v511 = vsel %vm103, %v510, 0
    %513 = vmatpush.msra.mxu0 0.0
    %514 = vmatpush.msra.mxu0 0.0
    %515 = vmatpush.msra.mxu0 0.0
    %516 = vmatpush.msra.mxu0 0.0
    %517 = vmatpush.msra.mxu0 0.0
    %518 = vmatpush.msra.mxu0 0.0
    %519 = vmatpush.msra.mxu0 0.0
    %520 = vmatpush.msra.mxu0 0.0
    %521 = vmatpush.msra.mxu0 0.0
    %522 = vmatpush.msra.mxu0 0.0
    %523 = vmatpush.msra.mxu0 0.0
    %524 = vmatpush.msra.mxu0 0.0
    %525 = vmatpush.msra.mxu0 %v49
    %526 = vmatpush.msra.mxu0 %v48
    %527 = vmatpush.msra.mxu0 %v47
    %528 = vmatpush.msra.mxu0 %v46
    %529 = vmatmul.f32.gmra.mxu0 %v511
    %v530 = vpop.f32.mrf.mxu0
    %v531 = vadd.f32 0.0, %v530
    %532 = vdwg.mxu0
    %v534 = vrot.slane %v531, 2
    %v536 = vadd.f32 %v94, %v534
    %v537 = vxor.u32 %v536, 2147483648
    %v538 = vmul.f32 %v537, 1.442695
    %v539 = vpow.pop %v538
    %v540 = vadd.f32 %v539, 1.0
    %v541 = vrcp.pop %v540
    %v542 = vmul.f32 %v540, %v541
    %v543 = vsub.f32 1.0, %v542
    %v544 = vmul.f32 %v541, %v543
    %v545 = vadd.f32 %v541, %v544
    %vm546 = vweird.f32 %v540
    %vm547 = vweird.f32 %v541
    %vm548 = vmor %vm546, %vm547
    %v549 = vsel %vm548, %v541, %v545
    %v550 = vand.u32 2147483647, %v540
    %vm551 = vcmp.eq.f32.partialorder %v550, 8.507059e+37
    %v552 = vand.u32 %v540, 2147483648
    %v553 = vor.u32 1.1754944e-38, %v552
    %v554 = vsel %vm551, %v553, %v549
    %v555 = vmul.f32 1.0, %v554
    %v556 = vtanh.pop %v536
    %v558 = vrot.slane %v430, 6
    %v560 = vmul.f32 %v555, %v558
    %562 = vrot.lane.b32.xlu0 %v556, 64
    %v563 = vpop.permute.xlu0 %562
    %v565 = vmul.f32 %v555, %v563
    %567 = vrot.lane.b32.xlu0 %v565, 32
    %v568 = vpop.permute.xlu0 %567
    %v570 = vadd.f32 %v560, %v568
    %v571 = vtanh.pop %v570
    %573 = vrot.lane.b32.xlu0 %v571, 64
    %v574 = vpop.permute.xlu0 %573
    %v576 = vmul.f32 %v555, %v574
    %578 = vrot.lane.b32.xlu0 %v576, 32
    %v579 = vpop.permute.xlu0 %578
    %v582 = vrot.slane %v507, 2
    %583 = vrot.lane.b32.xlu0 %v582, 64
    %v584 = vpop.permute.xlu0 %583
    %v586 = vsel %vm103, %v579, %v584
    %v588 = vrot.slane %v586, 6
    %v589 = vsel %vm170, %v588, 0
    %591 = vmatpush.msra.mxu0 0.0
    %592 = vmatpush.msra.mxu0 0.0
    %593 = vmatpush.msra.mxu0 0.0
    %594 = vmatpush.msra.mxu0 0.0
    %595 = vmatpush.msra.mxu0 0.0
    %596 = vmatpush.msra.mxu0 0.0
    %597 = vmatpush.msra.mxu0 0.0
    %598 = vmatpush.msra.mxu0 0.0
    %599 = vmatpush.msra.mxu0 %v57
    %600 = vmatpush.msra.mxu0 %v56
    %601 = vmatpush.msra.mxu0 %v55
    %602 = vmatpush.msra.mxu0 %v54
    %603 = vmatpush.msra.mxu0 %v53
    %604 = vmatpush.msra.mxu0 %v52
    %605 = vmatpush.msra.mxu0 %v51
    %606 = vmatpush.msra.mxu0 %v50
    %607 = vmatmul.f32.gmra.mxu0 %v589
    %v608 = vpop.f32.mrf.mxu0
    %v609 = vadd.f32 %v101, %v608
    %610 = vdwg.mxu0
    %v611 = vxor.u32 %v609, 2147483648
    %v612 = vmul.f32 %v611, 1.442695
    %v613 = vpow.pop %v612
    %v614 = vadd.f32 %v613, 1.0
    %v615 = vrcp.pop %v614
    %v616 = vmul.f32 %v614, %v615
    %v617 = vsub.f32 1.0, %v616
    %v618 = vmul.f32 %v615, %v617
    %v619 = vadd.f32 %v615, %v618
    %vm620 = vweird.f32 %v614
    %vm621 = vweird.f32 %v615
    %vm622 = vmor %vm620, %vm621
    %v623 = vsel %vm622, %v615, %v619
    %v624 = vand.u32 2147483647, %v614
    %vm625 = vcmp.eq.f32.partialorder %v624, 8.507059e+37
    %v626 = vand.u32 %v614, 2147483648
    %v627 = vor.u32 1.1754944e-38, %v626
    %v628 = vsel %vm625, %v627, %v623
    %v629 = vmul.f32 1.0, %v628
    %v630 = vtanh.pop %v609
    %v631 = vmul.f32 %v629, %v501
    %633 = vrot.lane.b32.xlu0 %v630, 64
    %v634 = vpop.permute.xlu0 %633
    %v636 = vmul.f32 %v629, %v634
    %638 = vrot.lane.b32.xlu0 %v636, 32
    %v639 = vpop.permute.xlu0 %638
    %v641 = vadd.f32 %v631, %v639
    %v642 = vtanh.pop %v641
    %644 = vrot.lane.b32.xlu0 %v642, 64
    %v645 = vpop.permute.xlu0 %644
    %v647 = vmul.f32 %v629, %v645
    %v648 = vrot.slane %v576, 6
    %649 = vrot.lane.b32.xlu0 %v648, 32
    %v650 = vpop.permute.xlu0 %649
    %v651 = vsel %vm103, %v650, 0
    %653 = vmatpush.msra.mxu0 0.0
    %654 = vmatpush.msra.mxu0 0.0
    %655 = vmatpush.msra.mxu0 0.0
    %656 = vmatpush.msra.mxu0 0.0
    %657 = vmatpush.msra.mxu0 0.0
    %658 = vmatpush.msra.mxu0 0.0
    %659 = vmatpush.msra.mxu0 0.0
    %660 = vmatpush.msra.mxu0 0.0
    %661 = vmatpush.msra.mxu0 0.0
    %662 = vmatpush.msra.mxu0 0.0
    %663 = vmatpush.msra.mxu0 0.0
    %664 = vmatpush.msra.mxu0 0.0
    %665 = vmatpush.msra.mxu0 %v49
    %666 = vmatpush.msra.mxu0 %v48
    %667 = vmatpush.msra.mxu0 %v47
    %668 = vmatpush.msra.mxu0 %v46
    %669 = vmatmul.f32.gmra.mxu0 %v651
    %v670 = vpop.f32.mrf.mxu0
    %v671 = vadd.f32 0.0, %v670
    %672 = vdwg.mxu0
    %v673 = vadd.f32 %v97, %v671
    %v674 = vxor.u32 %v673, 2147483648
    %v675 = vmul.f32 %v674, 1.442695
    %v676 = vpow.pop %v675
    %v677 = vadd.f32 %v676, 1.0
    %v678 = vrcp.pop %v677
    %v679 = vmul.f32 %v677, %v678
    %v680 = vsub.f32 1.0, %v679
    %v681 = vmul.f32 %v678, %v680
    %v682 = vadd.f32 %v678, %v681
    %vm683 = vweird.f32 %v677
    %vm684 = vweird.f32 %v678
    %vm685 = vmor %vm683, %vm684
    %v686 = vsel %vm685, %v678, %v682
    %v687 = vand.u32 2147483647, %v677
    %vm688 = vcmp.eq.f32.partialorder %v687, 8.507059e+37
    %v689 = vand.u32 %v677, 2147483648
    %v690 = vor.u32 1.1754944e-38, %v689
    %v691 = vsel %vm688, %v690, %v686
    %v692 = vmul.f32 1.0, %v691
    %v693 = vtanh.pop %v673
    %v695 = vrot.slane %v570, 6
    %v697 = vmul.f32 %v692, %v695
    %699 = vrot.lane.b32.xlu0 %v693, 64
    %v700 = vpop.permute.xlu0 %699
    %v702 = vmul.f32 %v692, %v700
    %704 = vrot.lane.b32.xlu0 %v702, 32
    %v705 = vpop.permute.xlu0 %704
    %v707 = vadd.f32 %v697, %v705
    %v708 = vtanh.pop %v707
    %710 = vrot.lane.b32.xlu0 %v708, 64
    %v711 = vpop.permute.xlu0 %710
    %v713 = vmul.f32 %v692, %v711
    %715 = vrot.lane.b32.xlu0 %v713, 32
    %v716 = vpop.permute.xlu0 %715
    %719 = vrot.lane.b32.xlu0 %v647, 64
    %v720 = vpop.permute.xlu0 %719
    %v722 = vsel %vm103, %v716, %v720
    %v724 = vsel %vm170, %v722, 0
    %726 = vmatpush.msra.mxu0 0.0
    %727 = vmatpush.msra.mxu0 0.0
    %728 = vmatpush.msra.mxu0 0.0
    %729 = vmatpush.msra.mxu0 0.0
    %730 = vmatpush.msra.mxu0 0.0
    %731 = vmatpush.msra.mxu0 0.0
    %732 = vmatpush.msra.mxu0 0.0
    %733 = vmatpush.msra.mxu0 0.0
    %734 = vmatpush.msra.mxu0 %v57
    %735 = vmatpush.msra.mxu0 %v56
    %736 = vmatpush.msra.mxu0 %v55
    %737 = vmatpush.msra.mxu0 %v54
    %738 = vmatpush.msra.mxu0 %v53
    %739 = vmatpush.msra.mxu0 %v52
    %740 = vmatpush.msra.mxu0 %v51
    %741 = vmatpush.msra.mxu0 %v50
    %742 = vmatmul.f32.gmra.mxu0 %v724
    %v743 = vpop.f32.mrf.mxu0
    %v744 = vadd.f32 %v101, %v743
    %745 = vdwg.mxu0
    %v746 = vxor.u32 %v744, 2147483648
    %v747 = vmul.f32 %v746, 1.442695
    %v748 = vpow.pop %v747
    %v749 = vadd.f32 %v748, 1.0
    %v750 = vrcp.pop %v749
    %v751 = vmul.f32 %v749, %v750
    %v752 = vsub.f32 1.0, %v751
    %v753 = vmul.f32 %v750, %v752
    %v754 = vadd.f32 %v750, %v753
    %vm755 = vweird.f32 %v749
    %vm756 = vweird.f32 %v750
    %vm757 = vmor %vm755, %vm756
    %v758 = vsel %vm757, %v750, %v754
    %v759 = vand.u32 2147483647, %v749
    %vm760 = vcmp.eq.f32.partialorder %v759, 8.507059e+37
    %v761 = vand.u32 %v749, 2147483648
    %v762 = vor.u32 1.1754944e-38, %v761
    %v763 = vsel %vm760, %v762, %v758
    %v764 = vmul.f32 1.0, %v763
    %v765 = vtanh.pop %v744
    %v766 = vmul.f32 %v764, %v641
    %768 = vrot.lane.b32.xlu0 %v765, 64
    %v769 = vpop.permute.xlu0 %768
    %v771 = vmul.f32 %v764, %v769
    %773 = vrot.lane.b32.xlu0 %v771, 32
    %v774 = vpop.permute.xlu0 %773
    %v776 = vadd.f32 %v766, %v774
    %v777 = vtanh.pop %v776
    %779 = vrot.lane.b32.xlu0 %v777, 64
    %v780 = vpop.permute.xlu0 %779
    %v782 = vmul.f32 %v764, %v780
    %v783 = vsel %vm103, %v716, 0
    %785 = vmatpush.msra.mxu0 0.0
    %786 = vmatpush.msra.mxu0 0.0
    %787 = vmatpush.msra.mxu0 0.0
    %788 = vmatpush.msra.mxu0 0.0
    %789 = vmatpush.msra.mxu0 0.0
    %790 = vmatpush.msra.mxu0 0.0
    %791 = vmatpush.msra.mxu0 0.0
    %792 = vmatpush.msra.mxu0 0.0
    %793 = vmatpush.msra.mxu0 0.0
    %794 = vmatpush.msra.mxu0 0.0
    %795 = vmatpush.msra.mxu0 0.0
    %796 = vmatpush.msra.mxu0 0.0
    %797 = vmatpush.msra.mxu0 %v49
    %798 = vmatpush.msra.mxu0 %v48
    %799 = vmatpush.msra.mxu0 %v47
    %800 = vmatpush.msra.mxu0 %v46
    %801 = vmatmul.f32.gmra.mxu0 %v783
    %v802 = vpop.f32.mrf.mxu0
    %v803 = vadd.f32 0.0, %v802
    %804 = vdwg.mxu0
    %v806 = vrot.slane %v803, 6
    %v808 = vadd.f32 %v97, %v806
    %v809 = vxor.u32 %v808, 2147483648
    %v810 = vmul.f32 %v809, 1.442695
    %v811 = vpow.pop %v810
    %v812 = vadd.f32 %v811, 1.0
    %v813 = vrcp.pop %v812
    %v814 = vmul.f32 %v812, %v813
    %v815 = vsub.f32 1.0, %v814
    %v816 = vmul.f32 %v813, %v815
    %v817 = vadd.f32 %v813, %v816
    %vm818 = vweird.f32 %v812
    %vm819 = vweird.f32 %v813
    %vm820 = vmor %vm818, %vm819
    %v821 = vsel %vm820, %v813, %v817
    %v822 = vand.u32 2147483647, %v812
    %vm823 = vcmp.eq.f32.partialorder %v822, 8.507059e+37
    %v824 = vand.u32 %v812, 2147483648
    %v825 = vor.u32 1.1754944e-38, %v824
    %v826 = vsel %vm823, %v825, %v821
    %v827 = vmul.f32 1.0, %v826
    %v828 = vtanh.pop %v808
    %v830 = vrot.slane %v707, 6
    %v832 = vmul.f32 %v827, %v830
    %834 = vrot.lane.b32.xlu0 %v828, 64
    %v835 = vpop.permute.xlu0 %834
    %v837 = vmul.f32 %v827, %v835
    %839 = vrot.lane.b32.xlu0 %v837, 32
    %v840 = vpop.permute.xlu0 %839
    %v842 = vadd.f32 %v832, %v840
    %v843 = vtanh.pop %v842
    %845 = vrot.lane.b32.xlu0 %v843, 64
    %v846 = vpop.permute.xlu0 %845
    %v848 = vmul.f32 %v827, %v846
    %850 = vrot.lane.b32.xlu0 %v848, 32
    %v851 = vpop.permute.xlu0 %850
    %v854 = vrot.slane %v782, 6
    %855 = vrot.lane.b32.xlu0 %v854, 64
    %v856 = vpop.permute.xlu0 %855
    %v858 = vsel %vm103, %v851, %v856
    %v860 = vrot.slane %v858, 2
    %v861 = vsel %vm170, %v860, 0
    %863 = vmatpush.msra.mxu0 0.0
    %864 = vmatpush.msra.mxu0 0.0
    %865 = vmatpush.msra.mxu0 0.0
    %866 = vmatpush.msra.mxu0 0.0
    %867 = vmatpush.msra.mxu0 0.0
    %868 = vmatpush.msra.mxu0 0.0
    %869 = vmatpush.msra.mxu0 0.0
    %870 = vmatpush.msra.mxu0 0.0
    %871 = vmatpush.msra.mxu0 %v57
    %872 = vmatpush.msra.mxu0 %v56
    %873 = vmatpush.msra.mxu0 %v55
    %874 = vmatpush.msra.mxu0 %v54
    %875 = vmatpush.msra.mxu0 %v53
    %876 = vmatpush.msra.mxu0 %v52
    %877 = vmatpush.msra.mxu0 %v51
    %878 = vmatpush.msra.mxu0 %v50
    %879 = vmatmul.f32.gmra.mxu0 %v861
    %v880 = vpop.f32.mrf.mxu0
    %v881 = vadd.f32 %v101, %v880
    %882 = vdwg.mxu0
    %v883 = vxor.u32 %v881, 2147483648
    %v884 = vmul.f32 %v883, 1.442695
    %v885 = vpow.pop %v884
    %v886 = vadd.f32 %v885, 1.0
    %v887 = vrcp.pop %v886
    %v888 = vmul.f32 %v886, %v887
    %v889 = vsub.f32 1.0, %v888
    %v890 = vmul.f32 %v887, %v889
    %v891 = vadd.f32 %v887, %v890
    %vm892 = vweird.f32 %v886
    %vm893 = vweird.f32 %v887
    %vm894 = vmor %vm892, %vm893
    %v895 = vsel %vm894, %v887, %v891
    %v896 = vand.u32 2147483647, %v886
    %vm897 = vcmp.eq.f32.partialorder %v896, 8.507059e+37
    %v898 = vand.u32 %v886, 2147483648
    %v899 = vor.u32 1.1754944e-38, %v898
    %v900 = vsel %vm897, %v899, %v895
    %v901 = vmul.f32 1.0, %v900
    %v902 = vtanh.pop %v881
    %v903 = vmul.f32 %v901, %v776
    %905 = vrot.lane.b32.xlu0 %v902, 64
    %v906 = vpop.permute.xlu0 %905
    %v908 = vmul.f32 %v901, %v906
    %910 = vrot.lane.b32.xlu0 %v908, 32
    %v911 = vpop.permute.xlu0 %910
    %v913 = vadd.f32 %v903, %v911
    %v914 = vtanh.pop %v913
    %916 = vrot.lane.b32.xlu0 %v914, 64
    %v917 = vpop.permute.xlu0 %916
    %v919 = vmul.f32 %v901, %v917
    %v920 = vrot.slane %v848, 2
    %921 = vrot.lane.b32.xlu0 %v920, 32
    %v922 = vpop.permute.xlu0 %921
    %v923 = vsel %vm103, %v922, 0
    %925 = vmatpush.msra.mxu0 0.0
    %926 = vmatpush.msra.mxu0 0.0
    %927 = vmatpush.msra.mxu0 0.0
    %928 = vmatpush.msra.mxu0 0.0
    %929 = vmatpush.msra.mxu0 0.0
    %930 = vmatpush.msra.mxu0 0.0
    %931 = vmatpush.msra.mxu0 0.0
    %932 = vmatpush.msra.mxu0 0.0
    %933 = vmatpush.msra.mxu0 0.0
    %934 = vmatpush.msra.mxu0 0.0
    %935 = vmatpush.msra.mxu0 0.0
    %936 = vmatpush.msra.mxu0 0.0
    %937 = vmatpush.msra.mxu0 %v49
    %938 = vmatpush.msra.mxu0 %v48
    %939 = vmatpush.msra.mxu0 %v47
    %940 = vmatpush.msra.mxu0 %v46
    %941 = vmatmul.f32.gmra.mxu0 %v923
    %v942 = vpop.f32.mrf.mxu0
    %v943 = vadd.f32 0.0, %v942
    %944 = vdwg.mxu0
    %v946 = vrot.slane %v943, 4
    %v948 = vadd.f32 %v97, %v946
    %v949 = vxor.u32 %v948, 2147483648
    %v950 = vmul.f32 %v949, 1.442695
    %v951 = vpow.pop %v950
    %v952 = vadd.f32 %v951, 1.0
    %v953 = vrcp.pop %v952
    %v954 = vmul.f32 %v952, %v953
    %v955 = vsub.f32 1.0, %v954
    %v956 = vmul.f32 %v953, %v955
    %v957 = vadd.f32 %v953, %v956
    %vm958 = vweird.f32 %v952
    %vm959 = vweird.f32 %v953
    %vm960 = vmor %vm958, %vm959
    %v961 = vsel %vm960, %v953, %v957
    %v962 = vand.u32 2147483647, %v952
    %vm963 = vcmp.eq.f32.partialorder %v962, 8.507059e+37
    %v964 = vand.u32 %v952, 2147483648
    %v965 = vor.u32 1.1754944e-38, %v964
    %v966 = vsel %vm963, %v965, %v961
    %v967 = vmul.f32 1.0, %v966
    %v968 = vtanh.pop %v948
    %v970 = vrot.slane %v842, 6
    %v972 = vmul.f32 %v967, %v970
    %974 = vrot.lane.b32.xlu0 %v968, 64
    %v975 = vpop.permute.xlu0 %974
    %v977 = vmul.f32 %v967, %v975
    %979 = vrot.lane.b32.xlu0 %v977, 32
    %v980 = vpop.permute.xlu0 %979
    %v982 = vadd.f32 %v972, %v980
    %v983 = vtanh.pop %v982
    %985 = vrot.lane.b32.xlu0 %v983, 64
    %v986 = vpop.permute.xlu0 %985
    %v988 = vmul.f32 %v967, %v986
    %990 = vrot.lane.b32.xlu0 %v988, 32
    %v991 = vpop.permute.xlu0 %990
    %v994 = vrot.slane %v919, 4
    %995 = vrot.lane.b32.xlu0 %v994, 64
    %v996 = vpop.permute.xlu0 %995
    %v998 = vsel %vm103, %v991, %v996
    %v1000 = vrot.slane %v998, 4
    %v1001 = vsel %vm170, %v1000, 0
    %1003 = vmatpush.msra.mxu0 0.0
    %1004 = vmatpush.msra.mxu0 0.0
    %1005 = vmatpush.msra.mxu0 0.0
    %1006 = vmatpush.msra.mxu0 0.0
    %1007 = vmatpush.msra.mxu0 0.0
    %1008 = vmatpush.msra.mxu0 0.0
    %1009 = vmatpush.msra.mxu0 0.0
    %1010 = vmatpush.msra.mxu0 0.0
    %1011 = vmatpush.msra.mxu0 %v57
    %1012 = vmatpush.msra.mxu0 %v56
    %1013 = vmatpush.msra.mxu0 %v55
    %1014 = vmatpush.msra.mxu0 %v54
    %1015 = vmatpush.msra.mxu0 %v53
    %1016 = vmatpush.msra.mxu0 %v52
    %1017 = vmatpush.msra.mxu0 %v51
    %1018 = vmatpush.msra.mxu0 %v50
    %1019 = vmatmul.f32.gmra.mxu0 %v1001
    %v1020 = vpop.f32.mrf.mxu0
    %v1021 = vadd.f32 %v101, %v1020
    %1022 = vdwg.mxu0
    %v1023 = vxor.u32 %v1021, 2147483648
    %v1024 = vmul.f32 %v1023, 1.442695
    %v1025 = vpow.pop %v1024
    %v1026 = vadd.f32 %v1025, 1.0
    %v1027 = vrcp.pop %v1026
    %v1028 = vmul.f32 %v1026, %v1027
    %v1029 = vsub.f32 1.0, %v1028
    %v1030 = vmul.f32 %v1027, %v1029
    %v1031 = vadd.f32 %v1027, %v1030
    %vm1032 = vweird.f32 %v1026
    %vm1033 = vweird.f32 %v1027
    %vm1034 = vmor %vm1032, %vm1033
    %v1035 = vsel %vm1034, %v1027, %v1031
    %v1036 = vand.u32 2147483647, %v1026
    %vm1037 = vcmp.eq.f32.partialorder %v1036, 8.507059e+37
    %v1038 = vand.u32 %v1026, 2147483648
    %v1039 = vor.u32 1.1754944e-38, %v1038
    %v1040 = vsel %vm1037, %v1039, %v1035
    %v1041 = vmul.f32 1.0, %v1040
    %v1042 = vtanh.pop %v1021
    %v1043 = vmul.f32 %v1041, %v913
    %1045 = vrot.lane.b32.xlu0 %v1042, 64
    %v1046 = vpop.permute.xlu0 %1045
    %v1048 = vmul.f32 %v1041, %v1046
    %1050 = vrot.lane.b32.xlu0 %v1048, 32
    %v1051 = vpop.permute.xlu0 %1050
    %v1053 = vadd.f32 %v1043, %v1051
    %v1054 = vtanh.pop %v1053
    %1056 = vrot.lane.b32.xlu0 %v1054, 64
    %v1057 = vpop.permute.xlu0 %1056
    %v1059 = vmul.f32 %v1041, %v1057
    %v1060 = vrot.slane %v988, 4
    %1061 = vrot.lane.b32.xlu0 %v1060, 32
    %v1062 = vpop.permute.xlu0 %1061
    %v1063 = vsel %vm103, %v1062, 0
    %1065 = vmatpush.msra.mxu0 0.0
    %1066 = vmatpush.msra.mxu0 0.0
    %1067 = vmatpush.msra.mxu0 0.0
    %1068 = vmatpush.msra.mxu0 0.0
    %1069 = vmatpush.msra.mxu0 0.0
    %1070 = vmatpush.msra.mxu0 0.0
    %1071 = vmatpush.msra.mxu0 0.0
    %1072 = vmatpush.msra.mxu0 0.0
    %1073 = vmatpush.msra.mxu0 0.0
    %1074 = vmatpush.msra.mxu0 0.0
    %1075 = vmatpush.msra.mxu0 0.0
    %1076 = vmatpush.msra.mxu0 0.0
    %1077 = vmatpush.msra.mxu0 %v49
    %1078 = vmatpush.msra.mxu0 %v48
    %1079 = vmatpush.msra.mxu0 %v47
    %1080 = vmatpush.msra.mxu0 %v46
    %1081 = vmatmul.f32.gmra.mxu0 %v1063
    %v1082 = vpop.f32.mrf.mxu0
    %v1083 = vadd.f32 0.0, %v1082
    %1084 = vdwg.mxu0
    %v1086 = vrot.slane %v1083, 2
    %v1088 = vadd.f32 %v97, %v1086
    %v1089 = vxor.u32 %v1088, 2147483648
    %v1090 = vmul.f32 %v1089, 1.442695
    %v1091 = vpow.pop %v1090
    %v1092 = vadd.f32 %v1091, 1.0
    %v1093 = vrcp.pop %v1092
    %v1094 = vmul.f32 %v1092, %v1093
    %v1095 = vsub.f32 1.0, %v1094
    %v1096 = vmul.f32 %v1093, %v1095
    %v1097 = vadd.f32 %v1093, %v1096
    %vm1098 = vweird.f32 %v1092
    %vm1099 = vweird.f32 %v1093
    %vm1100 = vmor %vm1098, %vm1099
    %v1101 = vsel %vm1100, %v1093, %v1097
    %v1102 = vand.u32 2147483647, %v1092
    %vm1103 = vcmp.eq.f32.partialorder %v1102, 8.507059e+37
    %v1104 = vand.u32 %v1092, 2147483648
    %v1105 = vor.u32 1.1754944e-38, %v1104
    %v1106 = vsel %vm1103, %v1105, %v1101
    %v1107 = vmul.f32 1.0, %v1106
    %v1108 = vtanh.pop %v1088
    %v1110 = vrot.slane %v982, 6
    %v1112 = vmul.f32 %v1107, %v1110
    %1114 = vrot.lane.b32.xlu0 %v1108, 64
    %v1115 = vpop.permute.xlu0 %1114
    %v1117 = vmul.f32 %v1107, %v1115
    %1119 = vrot.lane.b32.xlu0 %v1117, 32
    %v1120 = vpop.permute.xlu0 %1119
    %v1122 = vadd.f32 %v1112, %v1120
    %v1123 = vtanh.pop %v1122
    %1125 = vrot.lane.b32.xlu0 %v1123, 64
    %v1126 = vpop.permute.xlu0 %1125
    %v1128 = vmul.f32 %v1107, %v1126
    %1130 = vrot.lane.b32.xlu0 %v1128, 32
    %v1131 = vpop.permute.xlu0 %1130
    %v1134 = vrot.slane %v1059, 2
    %1135 = vrot.lane.b32.xlu0 %v1134, 64
    %v1136 = vpop.permute.xlu0 %1135
    %v1138 = vsel %vm103, %v1131, %v1136
    %v1140 = vrot.slane %v1138, 6
    %v1141 = vsel %vm170, %v1140, 0
    %1143 = vmatpush.msra.mxu0 0.0
    %1144 = vmatpush.msra.mxu0 0.0
    %1145 = vmatpush.msra.mxu0 0.0
    %1146 = vmatpush.msra.mxu0 0.0
    %1147 = vmatpush.msra.mxu0 0.0
    %1148 = vmatpush.msra.mxu0 0.0
    %1149 = vmatpush.msra.mxu0 0.0
    %1150 = vmatpush.msra.mxu0 0.0
    %1151 = vmatpush.msra.mxu0 %v57
    %1152 = vmatpush.msra.mxu0 %v56
    %1153 = vmatpush.msra.mxu0 %v55
    %1154 = vmatpush.msra.mxu0 %v54
    %1155 = vmatpush.msra.mxu0 %v53
    %1156 = vmatpush.msra.mxu0 %v52
    %1157 = vmatpush.msra.mxu0 %v51
    %1158 = vmatpush.msra.mxu0 %v50
    %1159 = vmatmul.f32.gmra.mxu0 %v1141
    %v1160 = vpop.f32.mrf.mxu0
    %v1161 = vadd.f32 %v101, %v1160
    %1162 = vdwg.mxu0
    %v1163 = vxor.u32 %v1161, 2147483648
    %v1164 = vmul.f32 %v1163, 1.442695
    %v1165 = vpow.pop %v1164
    %v1166 = vadd.f32 %v1165, 1.0
    %v1167 = vrcp.pop %v1166
    %v1168 = vmul.f32 %v1166, %v1167
    %v1169 = vsub.f32 1.0, %v1168
    %v1170 = vmul.f32 %v1167, %v1169
    %v1171 = vadd.f32 %v1167, %v1170
    %vm1172 = vweird.f32 %v1166
    %vm1173 = vweird.f32 %v1167
    %vm1174 = vmor %vm1172, %vm1173
    %v1175 = vsel %vm1174, %v1167, %v1171
    %v1176 = vand.u32 2147483647, %v1166
    %vm1177 = vcmp.eq.f32.partialorder %v1176, 8.507059e+37
    %v1178 = vand.u32 %v1166, 2147483648
    %v1179 = vor.u32 1.1754944e-38, %v1178
    %v1180 = vsel %vm1177, %v1179, %v1175
    %v1181 = vmul.f32 1.0, %v1180
    %v1182 = vtanh.pop %v1161
    %v1183 = vmul.f32 %v1181, %v1053
    %1185 = vrot.lane.b32.xlu0 %v1182, 64
    %v1186 = vpop.permute.xlu0 %1185
    %v1188 = vmul.f32 %v1181, %v1186
    %1190 = vrot.lane.b32.xlu0 %v1188, 32
    %v1191 = vpop.permute.xlu0 %1190
    %v1193 = vadd.f32 %v1183, %v1191
    %v1194 = vtanh.pop %v1193
    %1196 = vrot.lane.b32.xlu0 %v1194, 64
    %v1197 = vpop.permute.xlu0 %1196
    %v1199 = vmul.f32 %v1181, %v1197
    %v1200 = vld [vmem:[%s6] sm:$0xff]
    %v1201 = vld [vmem:[%s6 + $0x8] sm:$0xff]
    %v1202 = vld [vmem:[%s6 + $0x10] sm:$0xff]
    %v1203 = vld [vmem:[%s6 + $0x18] sm:$0xff]
    %v1204 = vld [vmem:[%s7] sm:$0x1]
    %v1206 = vperm.slane %v1204, 0
    %1209 = vrot.lane.b32.xlu0 %v1199, 32
    %v1210 = vpop.permute.xlu0 %1209
    %v1211 = vsel %vm103, %v1210, 0
    %1213 = vmatpush.msra.mxu0 0.0
    %1214 = vmatpush.msra.mxu0 0.0
    %1215 = vmatpush.msra.mxu0 0.0
    %1216 = vmatpush.msra.mxu0 0.0
    %1217 = vmatpush.msra.mxu0 0.0
    %1218 = vmatpush.msra.mxu0 0.0
    %1219 = vmatpush.msra.mxu0 0.0
    %1220 = vmatpush.msra.mxu0 0.0
    %1221 = vmatpush.msra.mxu0 0.0
    %1222 = vmatpush.msra.mxu0 0.0
    %1223 = vmatpush.msra.mxu0 0.0
    %1224 = vmatpush.msra.mxu0 0.0
    %1225 = vmatpush.msra.mxu0 %v1203
    %1226 = vmatpush.msra.mxu0 %v1202
    %1227 = vmatpush.msra.mxu0 %v1201
    %1228 = vmatpush.msra.mxu0 %v1200
    %1229 = vmatmul.f32.gmra.mxu0 %v1211
    %v1230 = vpop.f32.mrf.mxu0
    %v1231 = vadd.f32 %v1206, %v1230
    %1232 = vdwg.mxu0
    %vm1233 = vcmask 25600
    %1234 = vst.msk [vmem:[#allocation5] sm:$0x3] %vm1233, %v1231
    // Predicated region
    $region38: #{tpu_custom_call.1} parent=1 // pred_check
      _
    $region39: #{tpu_custom_call.1} parent=1 // pred_check_branch
      %1236 = sbr.rel (0) target = $region41
    $region40: #{tpu_custom_call.1} parent=1 // pred_region
      %1238 = vsyncadd [#allocation4], 0
      %s1240 = sshll.u32 [#allocation5], 4
      %s1241 = int_to_ptr.vmem [resolvable:$true] %s1240
      %s1242 = sshll.u32 %s8, 4
      %s1243 = int_to_ptr.hbm [resolvable:$true] %s1242
      %1245 = dma.vmem_to_hbm [thread:$0]  %s1241, 32, %s1243, [#allocation4]
    $region41: #{tpu_custom_call.1} parent=1 // pred_fallthru
      _
    // Predicated region
    $region42: #{tpu_custom_call.1} parent=1 // pred_check
      _
    $region43: #{tpu_custom_call.1} parent=1 // pred_check_branch
      %1247 = sbr.rel (0) target = $region45
    $region44: #{tpu_custom_call.1} parent=1 // pred_region
      %1249 = dma.done [#allocation4], 32
    $region45: #{tpu_custom_call.1} parent=1 // pred_fallthru
      _
    %1250 = vsyncpa [#allocation3], 1
    %1251 = vsyncpa [#allocation4], 1

</llo_original>
